<compile_context>
chip_gen: v7x
topology: tpu7x:2x2x1
jax: 0.10.0
libtpu: 0.0.40
codegen_flags: <defaults>
</compile_context>

<pallas_src>
import functools
import math

import jax
import jax.numpy as jnp
from jax.experimental import pallas as pl
from jax.experimental.pallas import tpu as pltpu

D_MODEL = 32
N_HEAD = 4
HEAD_DIM = D_MODEL // N_HEAD
DIM_FF = 64
N_LAYERS = 6
LN_EPS = 1e-5  # PyTorch LayerNorm default


def _erf(x):
    # Abramowitz & Stegun 7.1.26 rational approximation (|err| < 1.5e-7):
    # matches PyTorch's exact-erf GELU to float32 precision using only
    # exp/mul/add (no erf primitive needed in-kernel).
    a1, a2, a3, a4, a5 = (0.254829592, -0.284496736, 1.421413741,
                          -1.453152027, 1.061405429)
    p = 0.3275911
    sign = jnp.where(x >= 0.0, 1.0, -1.0)
    z = jnp.abs(x)
    t = 1.0 / (1.0 + p * z)
    poly = ((((a5 * t + a4) * t + a3) * t + a2) * t + a1) * t
    return sign * (1.0 - poly * jnp.exp(-z * z))


def _gelu_exact(x):
    # PyTorch activation='gelu' default is the exact (erf) formulation.
    return 0.5 * x * (1.0 + _erf(x * 0.7071067811865476))


def _layernorm(x, w, b):
    mu = jnp.mean(x, axis=-1, keepdims=True)
    xc = x - mu
    var = jnp.mean(xc * xc, axis=-1, keepdims=True)
    inv = jax.lax.rsqrt(var + LN_EPS)
    return xc * inv * w + b


def fused_encoder_kernel(x_ref, wqkv_ref, bqkv_ref, wo_ref, bo_ref,
                         w1_ref, b1_ref, w2_ref, b2_ref,
                         ln1w_ref, ln1b_ref, ln2w_ref, ln2b_ref,
                         out_ref, act_ref, *, batch, seq):
    """One grid step == one encoder layer (grid axis 0 = layer index)."""
    # Initialize the VMEM-resident activation from the HBM input at layer 0.
    @pl.when(pl.program_id(0) == 0)
    def _():
        act_ref[...] = x_ref[...]

    x = act_ref[...]                                        # (B*S, D)

    # ---- QKV projection on the full (B*S, D) slab (batch folded into M).
    # 1/sqrt(head_dim) is already folded into the Q weight/bias at init.
    qkv = jnp.dot(x, wqkv_ref[0],
                  preferred_element_type=jnp.float32) + bqkv_ref[0]  # (B*S, 3D)
    q3 = qkv[:, :D_MODEL].reshape(batch, seq, D_MODEL)
    k3 = qkv[:, D_MODEL:2 * D_MODEL].reshape(batch, seq, D_MODEL)
    v3 = qkv[:, 2 * D_MODEL:].reshape(batch, seq, D_MODEL)

    # ---- multi-head self-attention: B-batched einsums per head.
    heads = []
    for h in range(N_HEAD):
        sl = slice(h * HEAD_DIM, (h + 1) * HEAD_DIM)
        qh, kh, vh = q3[..., sl], k3[..., sl], v3[..., sl]   # (B, S, Dh)
        s = jnp.einsum('bqd,bkd->bqk', qh, kh,
                       preferred_element_type=jnp.float32)  # (B, S, S)
        s = s - jnp.max(s, axis=-1, keepdims=True)
        e = jnp.exp(s)
        p = e / jnp.sum(e, axis=-1, keepdims=True)
        heads.append(jnp.einsum('bqk,bkd->bqd', p, vh,
                                preferred_element_type=jnp.float32))
    attn = jnp.concatenate(heads, axis=-1).reshape(batch * seq, D_MODEL)
    attn = jnp.dot(attn, wo_ref[0],
                   preferred_element_type=jnp.float32) + bo_ref[0]

    # ---- residual + LayerNorm 1 (post-norm; norm_first=False default).
    y = _layernorm(x + attn, ln1w_ref[0], ln1b_ref[0])

    # ---- feed-forward (linear1 -> gelu -> linear2); dropout=0.0 is a no-op.
    h1 = _gelu_exact(jnp.dot(y, w1_ref[0],
                             preferred_element_type=jnp.float32) + b1_ref[0])
    h2 = jnp.dot(h1, w2_ref[0],
                 preferred_element_type=jnp.float32) + b2_ref[0]

    # ---- residual + LayerNorm 2.
    result = _layernorm(y + h2, ln2w_ref[0], ln2b_ref[0])

    act_ref[...] = result                       # carry to the next layer
    out_ref[...] = result.astype(out_ref.dtype)  # written back to HBM once


def transformer_encoder_fwd(x, params):
    """Run all 6 encoder layers in a single fused pallas_call."""
    B, S, D = x.shape
    assert D == D_MODEL
    x2 = x.reshape(B * S, D)  # fold batch into the matmul M dimension

    kernel = functools.partial(fused_encoder_kernel, batch=B, seq=S)

    # Activation block is constant across the layer axis (loaded once,
    # resident in VMEM). Weight blocks are indexed by the layer id so Pallas
    # prefetches layer l+1's weights while layer l computes.
    in_specs = [pl.BlockSpec((B * S, D), lambda l: (0, 0))]
    in_specs += [pl.BlockSpec((1,) + p.shape[1:], lambda l: (l, 0, 0))
                 for p in params]

    out2 = pl.pallas_call(
        kernel,
        out_shape=jax.ShapeDtypeStruct((B * S, D), x.dtype),
        grid_spec=pltpu.PrefetchScalarGridSpec(
            num_scalar_prefetch=0,
            grid=(N_LAYERS,),
            in_specs=in_specs,
            out_specs=pl.BlockSpec((B * S, D), lambda l: (0, 0)),
            scratch_shapes=[pltpu.VMEM((B * S, D_MODEL), jnp.float32)],
        ),
        compiler_params=pltpu.CompilerParams(
            # Layers are sequentially dependent -> "arbitrary".
            dimension_semantics=("arbitrary",)),
    )(x2, *params)
    return out2.reshape(B, S, D)


def init_layer_params(key):
    """Deterministic synthetic parameters for one encoder layer.

    Layout consumed by the kernel (weights pre-transposed, biases 2-D):
      wqkv_T (D, 3D), bqkv (1, 3D), wo_T (D, D), bo (1, D),
      w1_T (D, FF),  b1 (1, FF),   w2_T (FF, D), b2 (1, D),
      ln1_w (1, D), ln1_b (1, D), ln2_w (1, D), ln2_b (1, D)
    The attention score scale 1/sqrt(head_dim) is folded into the Q rows.
    """
    ks = jax.random.split(key, 8)
    f32 = jnp.float32
    wqkv = jax.random.normal(ks[0], (3 * D_MODEL, D_MODEL), f32) * 0.05
    bqkv = jax.random.normal(ks[1], (3 * D_MODEL,), f32) * 0.02
    scale = 1.0 / math.sqrt(HEAD_DIM)
    wqkv = wqkv.at[:D_MODEL, :].multiply(scale)   # fold score scale into Q
    bqkv = bqkv.at[:D_MODEL].multiply(scale)
    wo = jax.random.normal(ks[2], (D_MODEL, D_MODEL), f32) * 0.05
    bo = jax.random.normal(ks[3], (D_MODEL,), f32) * 0.02
    w1 = jax.random.normal(ks[4], (DIM_FF, D_MODEL), f32) * 0.05
    b1 = jax.random.normal(ks[5], (DIM_FF,), f32) * 0.02
    w2 = jax.random.normal(ks[6], (D_MODEL, DIM_FF), f32) * 0.05
    b2 = jax.random.normal(ks[7], (D_MODEL,), f32) * 0.02
    ones = jnp.ones((1, D_MODEL), f32)
    zeros = jnp.zeros((1, D_MODEL), f32)
    return (wqkv.T, bqkv[None, :], wo.T, bo[None, :],
            w1.T, b1[None, :], w2.T, b2[None, :],
            ones, zeros, ones, zeros)


def init_encoder_params(key):
    """Stack each parameter across the 6 layers -> leading layer axis."""
    keys = jax.random.split(key, N_LAYERS)
    per_layer = [init_layer_params(k) for k in keys]
    n = len(per_layer[0])
    return tuple(jnp.stack([lp[i] for lp in per_layer], axis=0)
                 for i in range(n))


@jax.jit
def transformer_encoder_jit(x, params):
    return transformer_encoder_fwd(x, params)


def transformer_encoder(x, params, src_key_padding_mask=None):
    if src_key_padding_mask is not None:
        # TODO(synk): src_key_padding_mask path not implemented (module is
        # always invoked with the default None in this synthetic setting).
        raise NotImplementedError("src_key_padding_mask is not supported")
    return transformer_encoder_jit(x, params)


if __name__ == "__main__":
    key = jax.random.PRNGKey(0)
    k_x, k_p = jax.random.split(key)

    B, S = 2, 8
    x = jax.random.normal(k_x, (B, S, D_MODEL), jnp.float32)
    params = init_encoder_params(k_p)

    out = transformer_encoder(x, params)
    out = jax.block_until_ready(out)

    assert out.shape == (B, S, D_MODEL)
    assert bool(jnp.all(jnp.isfinite(out)))
    print("KERNEL_OK")
</pallas_src>

<mosaic_0001>
module attributes {stable_mosaic.version = 11 : i64} {
  func.func @fused_encoder_kernel(%arg0: i32, %arg1: memref<16x32xf32, #tpu.memory_space<vmem>>, %arg2: memref<1x32x96xf32, #tpu.memory_space<vmem>>, %arg3: memref<1x1x96xf32, #tpu.memory_space<vmem>>, %arg4: memref<1x32x32xf32, #tpu.memory_space<vmem>>, %arg5: memref<1x1x32xf32, #tpu.memory_space<vmem>>, %arg6: memref<1x32x64xf32, #tpu.memory_space<vmem>>, %arg7: memref<1x1x64xf32, #tpu.memory_space<vmem>>, %arg8: memref<1x64x32xf32, #tpu.memory_space<vmem>>, %arg9: memref<1x1x32xf32, #tpu.memory_space<vmem>>, %arg10: memref<1x1x32xf32, #tpu.memory_space<vmem>>, %arg11: memref<1x1x32xf32, #tpu.memory_space<vmem>>, %arg12: memref<1x1x32xf32, #tpu.memory_space<vmem>>, %arg13: memref<1x1x32xf32, #tpu.memory_space<vmem>>, %arg14: memref<16x32xf32, #tpu.memory_space<vmem>>, %arg15: memref<16x32xf32, #tpu.memory_space<vmem>>) attributes {dimension_semantics = [#tpu.dimension_semantics<arbitrary>], iteration_bounds = array<i64: 6>, scalar_prefetch = 0 : i64, scratch_operands = 1 : i64, tpu.core_type = #tpu.core_type<tc>, window_params = [{pipeline_mode = #tpu.pipeline_mode<synchronous>, transform_indices = @transform_0, window_bounds = array<i64: 16, 32>}, {transform_indices = @transform_1, window_bounds = array<i64: 1, 32, 96>}, {transform_indices = @transform_2, window_bounds = array<i64: 1, 1, 96>}, {transform_indices = @transform_3, window_bounds = array<i64: 1, 32, 32>}, {transform_indices = @transform_4, window_bounds = array<i64: 1, 1, 32>}, {transform_indices = @transform_5, window_bounds = array<i64: 1, 32, 64>}, {transform_indices = @transform_6, window_bounds = array<i64: 1, 1, 64>}, {transform_indices = @transform_7, window_bounds = array<i64: 1, 64, 32>}, {transform_indices = @transform_8, window_bounds = array<i64: 1, 1, 32>}, {transform_indices = @transform_9, window_bounds = array<i64: 1, 1, 32>}, {transform_indices = @transform_10, window_bounds = array<i64: 1, 1, 32>}, {transform_indices = @transform_11, window_bounds = array<i64: 1, 1, 32>}, {transform_indices = @transform_12, window_bounds = array<i64: 1, 1, 32>}, {pipeline_mode = #tpu.pipeline_mode<synchronous>, transform_indices = @transform_13, window_bounds = array<i64: 16, 32>}]} {
    %c0_i32 = arith.constant 0 : i32
    %0 = arith.cmpi eq, %arg0, %c0_i32 : i32
    %1 = arith.extui %0 : i1 to i32
    %c0_i32_0 = arith.constant 0 : i32
    %2 = arith.cmpi ne, %1, %c0_i32_0 : i32
    scf.if %2 {
      %c0_87 = arith.constant 0 : index
      %c0_88 = arith.constant 0 : index
      %189 = vector.load %arg1[%c0_87, %c0_88] : memref<16x32xf32, #tpu.memory_space<vmem>>, vector<16x32xf32>
      %c0_89 = arith.constant 0 : index
      %c0_90 = arith.constant 0 : index
      %190 = vector.load %arg15[%c0_89, %c0_90] : memref<16x32xf32, #tpu.memory_space<vmem>>, vector<16x32xf32>
      tpu.vector_store %arg15[%c0_89, %c0_90], %189 {strides = array<i32>} : memref<16x32xf32, #tpu.memory_space<vmem>>, vector<16x32xf32>,
    } else {
    }
    %c0 = arith.constant 0 : index
    %c0_1 = arith.constant 0 : index
    %3 = vector.load %arg15[%c0, %c0_1] : memref<16x32xf32, #tpu.memory_space<vmem>>, vector<16x32xf32>
    %c0_2 = arith.constant 0 : index
    %c0_3 = arith.constant 0 : index
    %c0_4 = arith.constant 0 : index
    %4 = vector.load %arg2[%c0_2, %c0_3, %c0_4] : memref<1x32x96xf32, #tpu.memory_space<vmem>>, vector<1x32x96xf32>
    %5 = vector.shape_cast %4 : vector<1x32x96xf32> to vector<32x96xf32>
    %cst = arith.constant dense<0.000000e+00> : vector<16x96xf32>
    %6 = tpu.matmul %3, %5, %cst {dimension_numbers = #tpu.dot_dimension_numbers<[1], [0], [0], [1], [0, 0, 1, 1], [], []>} : vector<16x32xf32>, vector<32x96xf32>, vector<16x96xf32> -> vector<16x96xf32>
    %c0_5 = arith.constant 0 : index
    %c0_6 = arith.constant 0 : index
    %c0_7 = arith.constant 0 : index
    %7 = vector.load %arg3[%c0_5, %c0_6, %c0_7] : memref<1x1x96xf32, #tpu.memory_space<vmem>>, vector<1x1x96xf32>
    %8 = vector.shape_cast %7 : vector<1x1x96xf32> to vector<1x96xf32>
    %9 = vector.broadcast %8 : vector<1x96xf32> to vector<16x96xf32>
    %10 = arith.addf %6, %9 : vector<16x96xf32>
    %11 = vector.extract_strided_slice %10 {offsets = [0, 0], sizes = [16, 32], strides = [1, 1]} : vector<16x96xf32> to vector<16x32xf32>
    %12 = vector.shape_cast %11 : vector<16x32xf32> to vector<2x8x32xf32>
    %13 = vector.extract_strided_slice %10 {offsets = [0, 32], sizes = [16, 32], strides = [1, 1]} : vector<16x96xf32> to vector<16x32xf32>
    %14 = vector.shape_cast %13 : vector<16x32xf32> to vector<2x8x32xf32>
    %15 = vector.extract_strided_slice %10 {offsets = [0, 64], sizes = [16, 32], strides = [1, 1]} : vector<16x96xf32> to vector<16x32xf32>
    %16 = vector.shape_cast %15 : vector<16x32xf32> to vector<2x8x32xf32>
    %17 = vector.extract_strided_slice %12 {offsets = [0, 0, 0], sizes = [2, 8, 8], strides = [1, 1, 1]} : vector<2x8x32xf32> to vector<2x8x8xf32>
    %18 = vector.extract_strided_slice %14 {offsets = [0, 0, 0], sizes = [2, 8, 8], strides = [1, 1, 1]} : vector<2x8x32xf32> to vector<2x8x8xf32>
    %19 = vector.extract_strided_slice %16 {offsets = [0, 0, 0], sizes = [2, 8, 8], strides = [1, 1, 1]} : vector<2x8x32xf32> to vector<2x8x8xf32>
    "tpu.trace_start"() <{level = 10 : i32, message = "bqd,bkd->bqk"}> : () -> ()
    %cst_8 = arith.constant dense<0.000000e+00> : vector<2x8x8xf32>
    %20 = tpu.matmul %17, %18, %cst_8 {dimension_numbers = #tpu.dot_dimension_numbers<[2], [2], [1], [1], [0, 0, 0, 1, 1, 1], [0], [0]>} : vector<2x8x8xf32>, vector<2x8x8xf32>, vector<2x8x8xf32> -> vector<2x8x8xf32>
    "tpu.trace_stop"() : () -> ()
    %cst_9 = arith.constant dense<0xFF800000> : vector<2x8xf32>
    %21 = vector.multi_reduction <maximumf>, %20, %cst_9 [2] : vector<2x8x8xf32> to vector<2x8xf32>
    %22 = vector.shape_cast %21 : vector<2x8xf32> to vector<2x8x1xf32>
    %23 = vector.broadcast %22 : vector<2x8x1xf32> to vector<2x8x8xf32>
    %24 = arith.subf %20, %23 : vector<2x8x8xf32>
    %25 = math.exp %24 : vector<2x8x8xf32>
    %cst_10 = arith.constant dense<0.000000e+00> : vector<2x8xf32>
    %26 = vector.multi_reduction <add>, %25, %cst_10 [2] : vector<2x8x8xf32> to vector<2x8xf32>
    %27 = vector.shape_cast %26 : vector<2x8xf32> to vector<2x8x1xf32>
    %28 = vector.broadcast %27 : vector<2x8x1xf32> to vector<2x8x8xf32>
    %29 = arith.divf %25, %28 : vector<2x8x8xf32>
    "tpu.trace_start"() <{level = 10 : i32, message = "bqk,bkd->bqd"}> : () -> ()
    %cst_11 = arith.constant dense<0.000000e+00> : vector<2x8x8xf32>
    %30 = tpu.matmul %29, %19, %cst_11 {dimension_numbers = #tpu.dot_dimension_numbers<[2], [1], [1], [2], [0, 0, 0, 1, 1, 2], [0], [0]>} : vector<2x8x8xf32>, vector<2x8x8xf32>, vector<2x8x8xf32> -> vector<2x8x8xf32>
    "tpu.trace_stop"() : () -> ()
    %31 = vector.extract_strided_slice %12 {offsets = [0, 0, 8], sizes = [2, 8, 8], strides = [1, 1, 1]} : vector<2x8x32xf32> to vector<2x8x8xf32>
    %32 = vector.extract_strided_slice %14 {offsets = [0, 0, 8], sizes = [2, 8, 8], strides = [1, 1, 1]} : vector<2x8x32xf32> to vector<2x8x8xf32>
    %33 = vector.extract_strided_slice %16 {offsets = [0, 0, 8], sizes = [2, 8, 8], strides = [1, 1, 1]} : vector<2x8x32xf32> to vector<2x8x8xf32>
    "tpu.trace_start"() <{level = 10 : i32, message = "bqd,bkd->bqk"}> : () -> ()
    %cst_12 = arith.constant dense<0.000000e+00> : vector<2x8x8xf32>
    %34 = tpu.matmul %31, %32, %cst_12 {dimension_numbers = #tpu.dot_dimension_numbers<[2], [2], [1], [1], [0, 0, 0, 1, 1, 1], [0], [0]>} : vector<2x8x8xf32>, vector<2x8x8xf32>, vector<2x8x8xf32> -> vector<2x8x8xf32>
    "tpu.trace_stop"() : () -> ()
    %cst_13 = arith.constant dense<0xFF800000> : vector<2x8xf32>
    %35 = vector.multi_reduction <maximumf>, %34, %cst_13 [2] : vector<2x8x8xf32> to vector<2x8xf32>
    %36 = vector.shape_cast %35 : vector<2x8xf32> to vector<2x8x1xf32>
    %37 = vector.broadcast %36 : vector<2x8x1xf32> to vector<2x8x8xf32>
    %38 = arith.subf %34, %37 : vector<2x8x8xf32>
    %39 = math.exp %38 : vector<2x8x8xf32>
    %cst_14 = arith.constant dense<0.000000e+00> : vector<2x8xf32>
    %40 = vector.multi_reduction <add>, %39, %cst_14 [2] : vector<2x8x8xf32> to vector<2x8xf32>
    %41 = vector.shape_cast %40 : vector<2x8xf32> to vector<2x8x1xf32>
    %42 = vector.broadcast %41 : vector<2x8x1xf32> to vector<2x8x8xf32>
    %43 = arith.divf %39, %42 : vector<2x8x8xf32>
    "tpu.trace_start"() <{level = 10 : i32, message = "bqk,bkd->bqd"}> : () -> ()
    %cst_15 = arith.constant dense<0.000000e+00> : vector<2x8x8xf32>
    %44 = tpu.matmul %43, %33, %cst_15 {dimension_numbers = #tpu.dot_dimension_numbers<[2], [1], [1], [2], [0, 0, 0, 1, 1, 2], [0], [0]>} : vector<2x8x8xf32>, vector<2x8x8xf32>, vector<2x8x8xf32> -> vector<2x8x8xf32>
    "tpu.trace_stop"() : () -> ()
    %45 = vector.extract_strided_slice %12 {offsets = [0, 0, 16], sizes = [2, 8, 8], strides = [1, 1, 1]} : vector<2x8x32xf32> to vector<2x8x8xf32>
    %46 = vector.extract_strided_slice %14 {offsets = [0, 0, 16], sizes = [2, 8, 8], strides = [1, 1, 1]} : vector<2x8x32xf32> to vector<2x8x8xf32>
    %47 = vector.extract_strided_slice %16 {offsets = [0, 0, 16], sizes = [2, 8, 8], strides = [1, 1, 1]} : vector<2x8x32xf32> to vector<2x8x8xf32>
    "tpu.trace_start"() <{level = 10 : i32, message = "bqd,bkd->bqk"}> : () -> ()
    %cst_16 = arith.constant dense<0.000000e+00> : vector<2x8x8xf32>
    %48 = tpu.matmul %45, %46, %cst_16 {dimension_numbers = #tpu.dot_dimension_numbers<[2], [2], [1], [1], [0, 0, 0, 1, 1, 1], [0], [0]>} : vector<2x8x8xf32>, vector<2x8x8xf32>, vector<2x8x8xf32> -> vector<2x8x8xf32>
    "tpu.trace_stop"() : () -> ()
    %cst_17 = arith.constant dense<0xFF800000> : vector<2x8xf32>
    %49 = vector.multi_reduction <maximumf>, %48, %cst_17 [2] : vector<2x8x8xf32> to vector<2x8xf32>
    %50 = vector.shape_cast %49 : vector<2x8xf32> to vector<2x8x1xf32>
    %51 = vector.broadcast %50 : vector<2x8x1xf32> to vector<2x8x8xf32>
    %52 = arith.subf %48, %51 : vector<2x8x8xf32>
    %53 = math.exp %52 : vector<2x8x8xf32>
    %cst_18 = arith.constant dense<0.000000e+00> : vector<2x8xf32>
    %54 = vector.multi_reduction <add>, %53, %cst_18 [2] : vector<2x8x8xf32> to vector<2x8xf32>
    %55 = vector.shape_cast %54 : vector<2x8xf32> to vector<2x8x1xf32>
    %56 = vector.broadcast %55 : vector<2x8x1xf32> to vector<2x8x8xf32>
    %57 = arith.divf %53, %56 : vector<2x8x8xf32>
    "tpu.trace_start"() <{level = 10 : i32, message = "bqk,bkd->bqd"}> : () -> ()
    %cst_19 = arith.constant dense<0.000000e+00> : vector<2x8x8xf32>
    %58 = tpu.matmul %57, %47, %cst_19 {dimension_numbers = #tpu.dot_dimension_numbers<[2], [1], [1], [2], [0, 0, 0, 1, 1, 2], [0], [0]>} : vector<2x8x8xf32>, vector<2x8x8xf32>, vector<2x8x8xf32> -> vector<2x8x8xf32>
    "tpu.trace_stop"() : () -> ()
    %59 = vector.extract_strided_slice %12 {offsets = [0, 0, 24], sizes = [2, 8, 8], strides = [1, 1, 1]} : vector<2x8x32xf32> to vector<2x8x8xf32>
    %60 = vector.extract_strided_slice %14 {offsets = [0, 0, 24], sizes = [2, 8, 8], strides = [1, 1, 1]} : vector<2x8x32xf32> to vector<2x8x8xf32>
    %61 = vector.extract_strided_slice %16 {offsets = [0, 0, 24], sizes = [2, 8, 8], strides = [1, 1, 1]} : vector<2x8x32xf32> to vector<2x8x8xf32>
    "tpu.trace_start"() <{level = 10 : i32, message = "bqd,bkd->bqk"}> : () -> ()
    %cst_20 = arith.constant dense<0.000000e+00> : vector<2x8x8xf32>
    %62 = tpu.matmul %59, %60, %cst_20 {dimension_numbers = #tpu.dot_dimension_numbers<[2], [2], [1], [1], [0, 0, 0, 1, 1, 1], [0], [0]>} : vector<2x8x8xf32>, vector<2x8x8xf32>, vector<2x8x8xf32> -> vector<2x8x8xf32>
    "tpu.trace_stop"() : () -> ()
    %cst_21 = arith.constant dense<0xFF800000> : vector<2x8xf32>
    %63 = vector.multi_reduction <maximumf>, %62, %cst_21 [2] : vector<2x8x8xf32> to vector<2x8xf32>
    %64 = vector.shape_cast %63 : vector<2x8xf32> to vector<2x8x1xf32>
    %65 = vector.broadcast %64 : vector<2x8x1xf32> to vector<2x8x8xf32>
    %66 = arith.subf %62, %65 : vector<2x8x8xf32>
    %67 = math.exp %66 : vector<2x8x8xf32>
    %cst_22 = arith.constant dense<0.000000e+00> : vector<2x8xf32>
    %68 = vector.multi_reduction <add>, %67, %cst_22 [2] : vector<2x8x8xf32> to vector<2x8xf32>
    %69 = vector.shape_cast %68 : vector<2x8xf32> to vector<2x8x1xf32>
    %70 = vector.broadcast %69 : vector<2x8x1xf32> to vector<2x8x8xf32>
    %71 = arith.divf %67, %70 : vector<2x8x8xf32>
    "tpu.trace_start"() <{level = 10 : i32, message = "bqk,bkd->bqd"}> : () -> ()
    %cst_23 = arith.constant dense<0.000000e+00> : vector<2x8x8xf32>
    %72 = tpu.matmul %71, %61, %cst_23 {dimension_numbers = #tpu.dot_dimension_numbers<[2], [1], [1], [2], [0, 0, 0, 1, 1, 2], [0], [0]>} : vector<2x8x8xf32>, vector<2x8x8xf32>, vector<2x8x8xf32> -> vector<2x8x8xf32>
    "tpu.trace_stop"() : () -> ()
    %73 = tpu.concatenate %30, %44, %58, %72 in 2 : vector<2x8x8xf32>, vector<2x8x8xf32>, vector<2x8x8xf32>, vector<2x8x8xf32> -> vector<2x8x32xf32>
    %74 = vector.shape_cast %73 : vector<2x8x32xf32> to vector<16x32xf32>
    %c0_24 = arith.constant 0 : index
    %c0_25 = arith.constant 0 : index
    %c0_26 = arith.constant 0 : index
    %75 = vector.load %arg4[%c0_24, %c0_25, %c0_26] : memref<1x32x32xf32, #tpu.memory_space<vmem>>, vector<1x32x32xf32>
    %76 = vector.shape_cast %75 : vector<1x32x32xf32> to vector<32x32xf32>
    %cst_27 = arith.constant dense<0.000000e+00> : vector<16x32xf32>
    %77 = tpu.matmul %74, %76, %cst_27 {dimension_numbers = #tpu.dot_dimension_numbers<[1], [0], [0], [1], [0, 0, 1, 1], [], []>} : vector<16x32xf32>, vector<32x32xf32>, vector<16x32xf32> -> vector<16x32xf32>
    %c0_28 = arith.constant 0 : index
    %c0_29 = arith.constant 0 : index
    %c0_30 = arith.constant 0 : index
    %78 = vector.load %arg5[%c0_28, %c0_29, %c0_30] : memref<1x1x32xf32, #tpu.memory_space<vmem>>, vector<1x1x32xf32>
    %79 = vector.shape_cast %78 : vector<1x1x32xf32> to vector<1x32xf32>
    %80 = vector.broadcast %79 : vector<1x32xf32> to vector<16x32xf32>
    %81 = arith.addf %77, %80 : vector<16x32xf32>
    %82 = arith.addf %3, %81 : vector<16x32xf32>
    %c0_31 = arith.constant 0 : index
    %c0_32 = arith.constant 0 : index
    %c0_33 = arith.constant 0 : index
    %83 = vector.load %arg10[%c0_31, %c0_32, %c0_33] : memref<1x1x32xf32, #tpu.memory_space<vmem>>, vector<1x1x32xf32>
    %84 = vector.shape_cast %83 : vector<1x1x32xf32> to vector<1x32xf32>
    %c0_34 = arith.constant 0 : index
    %c0_35 = arith.constant 0 : index
    %c0_36 = arith.constant 0 : index
    %85 = vector.load %arg11[%c0_34, %c0_35, %c0_36] : memref<1x1x32xf32, #tpu.memory_space<vmem>>, vector<1x1x32xf32>
    %86 = vector.shape_cast %85 : vector<1x1x32xf32> to vector<1x32xf32>
    %cst_37 = arith.constant dense<0.000000e+00> : vector<16xf32>
    %87 = vector.multi_reduction <add>, %82, %cst_37 [1] : vector<16x32xf32> to vector<16xf32>
    %88 = vector.shape_cast %87 : vector<16xf32> to vector<16x1xf32>
    %cst_38 = arith.constant 3.200000e+01 : f32
    %89 = vector.broadcast %cst_38 : f32 to vector<16x1xf32>
    %90 = arith.divf %88, %89 : vector<16x1xf32>
    %91 = vector.broadcast %90 : vector<16x1xf32> to vector<16x32xf32>
    %92 = arith.subf %82, %91 : vector<16x32xf32>
    %93 = arith.mulf %92, %92 : vector<16x32xf32>
    %cst_39 = arith.constant dense<0.000000e+00> : vector<16xf32>
    %94 = vector.multi_reduction <add>, %93, %cst_39 [1] : vector<16x32xf32> to vector<16xf32>
    %95 = vector.shape_cast %94 : vector<16xf32> to vector<16x1xf32>
    %cst_40 = arith.constant 3.200000e+01 : f32
    %96 = vector.broadcast %cst_40 : f32 to vector<16x1xf32>
    %97 = arith.divf %95, %96 : vector<16x1xf32>
    %cst_41 = arith.constant 9.99999974E-6 : f32
    %98 = vector.broadcast %cst_41 : f32 to vector<16x1xf32>
    %99 = arith.addf %97, %98 : vector<16x1xf32>
    %100 = math.rsqrt %99 : vector<16x1xf32>
    %101 = vector.broadcast %100 : vector<16x1xf32> to vector<16x32xf32>
    %102 = arith.mulf %92, %101 : vector<16x32xf32>
    %103 = vector.broadcast %84 : vector<1x32xf32> to vector<16x32xf32>
    %104 = arith.mulf %102, %103 : vector<16x32xf32>
    %105 = vector.broadcast %86 : vector<1x32xf32> to vector<16x32xf32>
    %106 = arith.addf %104, %105 : vector<16x32xf32>
    %c0_42 = arith.constant 0 : index
    %c0_43 = arith.constant 0 : index
    %c0_44 = arith.constant 0 : index
    %107 = vector.load %arg6[%c0_42, %c0_43, %c0_44] : memref<1x32x64xf32, #tpu.memory_space<vmem>>, vector<1x32x64xf32>
    %108 = vector.shape_cast %107 : vector<1x32x64xf32> to vector<32x64xf32>
    %cst_45 = arith.constant dense<0.000000e+00> : vector<16x64xf32>
    %109 = tpu.matmul %106, %108, %cst_45 {dimension_numbers = #tpu.dot_dimension_numbers<[1], [0], [0], [1], [0, 0, 1, 1], [], []>} : vector<16x32xf32>, vector<32x64xf32>, vector<16x64xf32> -> vector<16x64xf32>
    %c0_46 = arith.constant 0 : index
    %c0_47 = arith.constant 0 : index
    %c0_48 = arith.constant 0 : index
    %110 = vector.load %arg7[%c0_46, %c0_47, %c0_48] : memref<1x1x64xf32, #tpu.memory_space<vmem>>, vector<1x1x64xf32>
    %111 = vector.shape_cast %110 : vector<1x1x64xf32> to vector<1x64xf32>
    %112 = vector.broadcast %111 : vector<1x64xf32> to vector<16x64xf32>
    %113 = arith.addf %109, %112 : vector<16x64xf32>
    %cst_49 = arith.constant 5.000000e-01 : f32
    %114 = vector.broadcast %cst_49 : f32 to vector<16x64xf32>
    %115 = arith.mulf %114, %113 : vector<16x64xf32>
    %cst_50 = arith.constant 0.707106769 : f32
    %116 = vector.broadcast %cst_50 : f32 to vector<16x64xf32>
    %117 = arith.mulf %113, %116 : vector<16x64xf32>
    %cst_51 = arith.constant 0.000000e+00 : f32
    %118 = vector.broadcast %cst_51 : f32 to vector<16x64xf32>
    %119 = arith.cmpf oge, %117, %118 : vector<16x64xf32>
    %cst_52 = arith.constant 1.000000e+00 : f32
    %cst_53 = arith.constant -1.000000e+00 : f32
    %120 = vector.broadcast %cst_52 : f32 to vector<16x64xf32>
    %121 = vector.broadcast %cst_53 : f32 to vector<16x64xf32>
    %122 = arith.select %119, %120, %121 : vector<16x64xi1>, vector<16x64xf32>
    %123 = math.absf %117 : vector<16x64xf32>
    %cst_54 = arith.constant 0.327591091 : f32
    %124 = vector.broadcast %cst_54 : f32 to vector<16x64xf32>
    %125 = arith.mulf %124, %123 : vector<16x64xf32>
    %cst_55 = arith.constant 1.000000e+00 : f32
    %126 = vector.broadcast %cst_55 : f32 to vector<16x64xf32>
    %127 = arith.addf %126, %125 : vector<16x64xf32>
    %cst_56 = arith.constant 1.000000e+00 : f32
    %128 = vector.broadcast %cst_56 : f32 to vector<16x64xf32>
    %129 = arith.divf %128, %127 : vector<16x64xf32>
    %cst_57 = arith.constant 1.06140542 : f32
    %130 = vector.broadcast %cst_57 : f32 to vector<16x64xf32>
    %131 = arith.mulf %130, %129 : vector<16x64xf32>
    %cst_58 = arith.constant -1.45315206 : f32
    %132 = vector.broadcast %cst_58 : f32 to vector<16x64xf32>
    %133 = arith.addf %131, %132 : vector<16x64xf32>
    %134 = arith.mulf %133, %129 : vector<16x64xf32>
    %cst_59 = arith.constant 1.42141378 : f32
    %135 = vector.broadcast %cst_59 : f32 to vector<16x64xf32>
    %136 = arith.addf %134, %135 : vector<16x64xf32>
    %137 = arith.mulf %136, %129 : vector<16x64xf32>
    %cst_60 = arith.constant -0.284496725 : f32
    %138 = vector.broadcast %cst_60 : f32 to vector<16x64xf32>
    %139 = arith.addf %137, %138 : vector<16x64xf32>
    %140 = arith.mulf %139, %129 : vector<16x64xf32>
    %cst_61 = arith.constant 0.254829586 : f32
    %141 = vector.broadcast %cst_61 : f32 to vector<16x64xf32>
    %142 = arith.addf %140, %141 : vector<16x64xf32>
    %143 = arith.mulf %142, %129 : vector<16x64xf32>
    %cst_62 = arith.constant 0.000000e+00 : f32
    %144 = vector.broadcast %cst_62 : f32 to vector<16x64xf32>
    %145 = arith.subf %144, %123 : vector<16x64xf32>
    %146 = arith.mulf %145, %123 : vector<16x64xf32>
    %147 = math.exp %146 : vector<16x64xf32>
    %148 = arith.mulf %143, %147 : vector<16x64xf32>
    %cst_63 = arith.constant 1.000000e+00 : f32
    %149 = vector.broadcast %cst_63 : f32 to vector<16x64xf32>
    %150 = arith.subf %149, %148 : vector<16x64xf32>
    %151 = arith.mulf %122, %150 : vector<16x64xf32>
    %cst_64 = arith.constant 1.000000e+00 : f32
    %152 = vector.broadcast %cst_64 : f32 to vector<16x64xf32>
    %153 = arith.addf %152, %151 : vector<16x64xf32>
    %154 = arith.mulf %115, %153 : vector<16x64xf32>
    %c0_65 = arith.constant 0 : index
    %c0_66 = arith.constant 0 : index
    %c0_67 = arith.constant 0 : index
    %155 = vector.load %arg8[%c0_65, %c0_66, %c0_67] : memref<1x64x32xf32, #tpu.memory_space<vmem>>, vector<1x64x32xf32>
    %156 = vector.shape_cast %155 : vector<1x64x32xf32> to vector<64x32xf32>
    %cst_68 = arith.constant dense<0.000000e+00> : vector<16x32xf32>
    %157 = tpu.matmul %154, %156, %cst_68 {dimension_numbers = #tpu.dot_dimension_numbers<[1], [0], [0], [1], [0, 0, 1, 1], [], []>} : vector<16x64xf32>, vector<64x32xf32>, vector<16x32xf32> -> vector<16x32xf32>
    %c0_69 = arith.constant 0 : index
    %c0_70 = arith.constant 0 : index
    %c0_71 = arith.constant 0 : index
    %158 = vector.load %arg9[%c0_69, %c0_70, %c0_71] : memref<1x1x32xf32, #tpu.memory_space<vmem>>, vector<1x1x32xf32>
    %159 = vector.shape_cast %158 : vector<1x1x32xf32> to vector<1x32xf32>
    %160 = vector.broadcast %159 : vector<1x32xf32> to vector<16x32xf32>
    %161 = arith.addf %157, %160 : vector<16x32xf32>
    %162 = arith.addf %106, %161 : vector<16x32xf32>
    %c0_72 = arith.constant 0 : index
    %c0_73 = arith.constant 0 : index
    %c0_74 = arith.constant 0 : index
    %163 = vector.load %arg12[%c0_72, %c0_73, %c0_74] : memref<1x1x32xf32, #tpu.memory_space<vmem>>, vector<1x1x32xf32>
    %164 = vector.shape_cast %163 : vector<1x1x32xf32> to vector<1x32xf32>
    %c0_75 = arith.constant 0 : index
    %c0_76 = arith.constant 0 : index
    %c0_77 = arith.constant 0 : index
    %165 = vector.load %arg13[%c0_75, %c0_76, %c0_77] : memref<1x1x32xf32, #tpu.memory_space<vmem>>, vector<1x1x32xf32>
    %166 = vector.shape_cast %165 : vector<1x1x32xf32> to vector<1x32xf32>
    %cst_78 = arith.constant dense<0.000000e+00> : vector<16xf32>
    %167 = vector.multi_reduction <add>, %162, %cst_78 [1] : vector<16x32xf32> to vector<16xf32>
    %168 = vector.shape_cast %167 : vector<16xf32> to vector<16x1xf32>
    %cst_79 = arith.constant 3.200000e+01 : f32
    %169 = vector.broadcast %cst_79 : f32 to vector<16x1xf32>
    %170 = arith.divf %168, %169 : vector<16x1xf32>
    %171 = vector.broadcast %170 : vector<16x1xf32> to vector<16x32xf32>
    %172 = arith.subf %162, %171 : vector<16x32xf32>
    %173 = arith.mulf %172, %172 : vector<16x32xf32>
    %cst_80 = arith.constant dense<0.000000e+00> : vector<16xf32>
    %174 = vector.multi_reduction <add>, %173, %cst_80 [1] : vector<16x32xf32> to vector<16xf32>
    %175 = vector.shape_cast %174 : vector<16xf32> to vector<16x1xf32>
    %cst_81 = arith.constant 3.200000e+01 : f32
    %176 = vector.broadcast %cst_81 : f32 to vector<16x1xf32>
    %177 = arith.divf %175, %176 : vector<16x1xf32>
    %cst_82 = arith.constant 9.99999974E-6 : f32
    %178 = vector.broadcast %cst_82 : f32 to vector<16x1xf32>
    %179 = arith.addf %177, %178 : vector<16x1xf32>
    %180 = math.rsqrt %179 : vector<16x1xf32>
    %181 = vector.broadcast %180 : vector<16x1xf32> to vector<16x32xf32>
    %182 = arith.mulf %172, %181 : vector<16x32xf32>
    %183 = vector.broadcast %164 : vector<1x32xf32> to vector<16x32xf32>
    %184 = arith.mulf %182, %183 : vector<16x32xf32>
    %185 = vector.broadcast %166 : vector<1x32xf32> to vector<16x32xf32>
    %186 = arith.addf %184, %185 : vector<16x32xf32>
    %c0_83 = arith.constant 0 : index
    %c0_84 = arith.constant 0 : index
    %187 = vector.load %arg15[%c0_83, %c0_84] : memref<16x32xf32, #tpu.memory_space<vmem>>, vector<16x32xf32>
    tpu.vector_store %arg15[%c0_83, %c0_84], %186 {strides = array<i32>} : memref<16x32xf32, #tpu.memory_space<vmem>>, vector<16x32xf32>,
    %c0_85 = arith.constant 0 : index
    %c0_86 = arith.constant 0 : index
    %188 = vector.load %arg14[%c0_85, %c0_86] : memref<16x32xf32, #tpu.memory_space<vmem>>, vector<16x32xf32>
    tpu.vector_store %arg14[%c0_85, %c0_86], %186 {strides = array<i32>} : memref<16x32xf32, #tpu.memory_space<vmem>>, vector<16x32xf32>,
    return
  }
  func.func @transform_0(%arg0: i32) -> (i32, i32) {
    %c0_i32 = arith.constant 0 : i32
    %c0_i32_0 = arith.constant 0 : i32
    %c0_i32_1 = arith.constant 0 : i32
    return %c0_i32, %c0_i32_0 : i32, i32
  }
  func.func @transform_1(%arg0: i32) -> (i32, i32, i32) {
    %c0_i32 = arith.constant 0 : i32
    %c0_i32_0 = arith.constant 0 : i32
    %c0_i32_1 = arith.constant 0 : i32
    return %arg0, %c0_i32, %c0_i32_0 : i32, i32, i32
  }
  func.func @transform_2(%arg0: i32) -> (i32, i32, i32) {
    %c0_i32 = arith.constant 0 : i32
    %c0_i32_0 = arith.constant 0 : i32
    %c0_i32_1 = arith.constant 0 : i32
    return %arg0, %c0_i32, %c0_i32_0 : i32, i32, i32
  }
  func.func @transform_3(%arg0: i32) -> (i32, i32, i32) {
    %c0_i32 = arith.constant 0 : i32
    %c0_i32_0 = arith.constant 0 : i32
    %c0_i32_1 = arith.constant 0 : i32
    return %arg0, %c0_i32, %c0_i32_0 : i32, i32, i32
  }
  func.func @transform_4(%arg0: i32) -> (i32, i32, i32) {
    %c0_i32 = arith.constant 0 : i32
    %c0_i32_0 = arith.constant 0 : i32
    %c0_i32_1 = arith.constant 0 : i32
    return %arg0, %c0_i32, %c0_i32_0 : i32, i32, i32
  }
  func.func @transform_5(%arg0: i32) -> (i32, i32, i32) {
    %c0_i32 = arith.constant 0 : i32
    %c0_i32_0 = arith.constant 0 : i32
    %c0_i32_1 = arith.constant 0 : i32
    return %arg0, %c0_i32, %c0_i32_0 : i32, i32, i32
  }
  func.func @transform_6(%arg0: i32) -> (i32, i32, i32) {
    %c0_i32 = arith.constant 0 : i32
    %c0_i32_0 = arith.constant 0 : i32
    %c0_i32_1 = arith.constant 0 : i32
    return %arg0, %c0_i32, %c0_i32_0 : i32, i32, i32
  }
  func.func @transform_7(%arg0: i32) -> (i32, i32, i32) {
    %c0_i32 = arith.constant 0 : i32
    %c0_i32_0 = arith.constant 0 : i32
    %c0_i32_1 = arith.constant 0 : i32
    return %arg0, %c0_i32, %c0_i32_0 : i32, i32, i32
  }
  func.func @transform_8(%arg0: i32) -> (i32, i32, i32) {
    %c0_i32 = arith.constant 0 : i32
    %c0_i32_0 = arith.constant 0 : i32
    %c0_i32_1 = arith.constant 0 : i32
    return %arg0, %c0_i32, %c0_i32_0 : i32, i32, i32
  }
  func.func @transform_9(%arg0: i32) -> (i32, i32, i32) {
    %c0_i32 = arith.constant 0 : i32
    %c0_i32_0 = arith.constant 0 : i32
    %c0_i32_1 = arith.constant 0 : i32
    return %arg0, %c0_i32, %c0_i32_0 : i32, i32, i32
  }
  func.func @transform_10(%arg0: i32) -> (i32, i32, i32) {
    %c0_i32 = arith.constant 0 : i32
    %c0_i32_0 = arith.constant 0 : i32
    %c0_i32_1 = arith.constant 0 : i32
    return %arg0, %c0_i32, %c0_i32_0 : i32, i32, i32
  }
  func.func @transform_11(%arg0: i32) -> (i32, i32, i32) {
    %c0_i32 = arith.constant 0 : i32
    %c0_i32_0 = arith.constant 0 : i32
    %c0_i32_1 = arith.constant 0 : i32
    return %arg0, %c0_i32, %c0_i32_0 : i32, i32, i32
  }
  func.func @transform_12(%arg0: i32) -> (i32, i32, i32) {
    %c0_i32 = arith.constant 0 : i32
    %c0_i32_0 = arith.constant 0 : i32
    %c0_i32_1 = arith.constant 0 : i32
    return %arg0, %c0_i32, %c0_i32_0 : i32, i32, i32
  }
  func.func @transform_13(%arg0: i32) -> (i32, i32) {
    %c0_i32 = arith.constant 0 : i32
    %c0_i32_0 = arith.constant 0 : i32
    %c0_i32_1 = arith.constant 0 : i32
    return %c0_i32, %c0_i32_0 : i32, i32
  }
}

</mosaic_0001>

<llo_original>
// kernel: transformer_encoder_jit.1
$region0: #{transformer_encoder_jit.1}
  #allocation0 [shape = 'u32[]', space=smem, size = 0x4, offset = 0x4, fixed_abs, tag = 'smem constant byte address 0x4 - core index']
  #allocation1 [shape = 'u32[144,128]{1,0:T(1,128)}', space=vmem, size = 0x12000, scoped, tag = 'internal scratch']
  #allocation2 [shape = 'f32[16,32]{1,0:T(8,128)}', space=vmem, size = 0x2000, scoped, tag = 'scratch operand']
  %s0 = inlined_call_operand.hbm [shape: f32[16,32], index: 0, kind: input, shape index: {}]
  %s1 = inlined_call_operand.vmem [shape: f32[6,32,96], index: 1, kind: input, shape index: {}]
  %s2 = inlined_call_operand.vmem [shape: f32[6,1,96], index: 2, kind: input, shape index: {}]
  %s3 = inlined_call_operand.vmem [shape: f32[6,32,32], index: 3, kind: input, shape index: {}]
  %s4 = inlined_call_operand.vmem [shape: f32[6,1,32], index: 4, kind: input, shape index: {}]
  %s5 = inlined_call_operand.vmem [shape: f32[6,32,64], index: 5, kind: input, shape index: {}]
  %s6 = inlined_call_operand.vmem [shape: f32[6,1,64], index: 6, kind: input, shape index: {}]
  %s7 = inlined_call_operand.vmem [shape: f32[6,64,32], index: 7, kind: input, shape index: {}]
  %s8 = inlined_call_operand.vmem [shape: f32[6,1,32], index: 8, kind: input, shape index: {}]
  %s9 = inlined_call_operand.vmem [shape: f32[6,1,32], index: 9, kind: input, shape index: {}]
  %s10 = inlined_call_operand.vmem [shape: f32[6,1,32], index: 10, kind: input, shape index: {}]
  %s11 = inlined_call_operand.vmem [shape: f32[6,1,32], index: 11, kind: input, shape index: {}]
  %s12 = inlined_call_operand.hbm [shape: f32[6,1,32], index: 12, kind: input, shape index: {}]
  %s13 = inlined_call_operand.hbm [shape: f32[16,32], index: 13, kind: output, shape index: {}]
  %s14 = sld [smem:[#allocation0]]
  $region97: #{transformer_encoder_jit.1} parent=0
    _
  %s16 = ssub.s32 1, %s14
  %s17 = scalar_select 0, %s16, %s14
  $region1: #{transformer_encoder_jit.1} parent=0
    #allocation3 [shape = 'u8[8192]{0}', space=vmem, size = 0x2000, scoped, tag = 'input window, operand 0, single buffered']
    #allocation4 [shape = 's32[2]{0}', space=sflag, size = 0x8, scoped, tag = 'scoped memory for transformer_encoder_jit.1']
    #allocation5 [shape = 's32[2]{0}', space=sflag, size = 0x8, scoped, tag = 'scoped memory for transformer_encoder_jit.1']
    #allocation6 [shape = 'u8[1024]{0}', space=vmem, size = 0x400, scoped, tag = 'input window, operand 12']
    #allocation7 [shape = 's32[2]{0}', space=sflag, size = 0x8, scoped, tag = 'scoped memory for transformer_encoder_jit.1']
    #allocation8 [shape = 'u8[8192]{0}', space=vmem, size = 0x2000, scoped, tag = 'output window, operand 0, single buffered']
    %18 = vsyncpa [#allocation4], 0
    %19 = vsyncpa [#allocation7], 0
    %s20 = scalar_lea.sflag [#allocation7], 1
    %21 = vsyncpa %s20, 0
    %22 = vsyncpa [#allocation5], 0
    loop: start=0, step=1, limit=8
    $region2: #{transformer_encoder_jit.1} parent=1 // loop_pre_header
      _
    $region3: #{transformer_encoder_jit.1} parent=1 // loop_header
      %s24 = sphi 0, %s28
      %p25 = scmp.ge.s32.totalorder %s24, 8
      %s32 = sphi 0, %s32
      %s34 = sphi 0, %s32
      %s35 = sphi 0, %s34
      %s49 = sphi 0, %s35
      %s55 = sphi 0, %s57
      %s58 = sphi 0, %s55
      %s59 = sphi 0, %s58
      %s75 = sphi 0, %s59
      %s81 = sphi 0, %s83
      %s84 = sphi 0, %s81
      %s85 = sphi 0, %s84
      %s101 = sphi 0, %s85
      %s107 = sphi 0, %s109
      %s110 = sphi 0, %s107
      %s111 = sphi 0, %s110
      %s127 = sphi 0, %s111
      %s133 = sphi 0, %s135
      %s136 = sphi 0, %s133
      %s137 = sphi 0, %s136
      %s153 = sphi 0, %s137
      %s159 = sphi 0, %s161
      %s162 = sphi 0, %s159
      %s163 = sphi 0, %s162
      %s179 = sphi 0, %s163
      %s185 = sphi 0, %s187
      %s188 = sphi 0, %s185
      %s189 = sphi 0, %s188
      %s205 = sphi 0, %s189
      %s211 = sphi 0, %s213
      %s214 = sphi 0, %s211
      %s215 = sphi 0, %s214
      %s231 = sphi 0, %s215
      %s237 = sphi 0, %s239
      %s240 = sphi 0, %s237
      %s241 = sphi 0, %s240
      %s257 = sphi 0, %s241
      %s263 = sphi 0, %s265
      %s266 = sphi 0, %s263
      %s267 = sphi 0, %s266
      %s283 = sphi 0, %s267
      %s289 = sphi 0, %s291
      %s292 = sphi 0, %s289
      %s293 = sphi 0, %s292
      %s309 = sphi 0, %s293
      %s315 = sphi 0, %s317
      %s318 = sphi 0, %s315
      %s319 = sphi 0, %s318
      %s335 = sphi 0, %s319
      %s341 = sphi 0, %s343
      %s344 = sphi 0, %s341
      %s345 = sphi 0, %s344
      %s361 = sphi 0, %s345
      %s365 = sphi 0, %s365
      %s367 = sphi 0, %s365
      %s368 = sphi 0, %s367
      %s382 = sphi 0, %s368
    $region4: #{transformer_encoder_jit.1} parent=1 // loop_header_branch
      %27 = sbr.rel (%p25) target = $region8
    $region5: #{transformer_encoder_jit.1} parent=1 // loop_body
      %s29 = ssub.s32 %s24, 1
      %s30 = ssub.s32 %s24, 2
      %s31 = sadd.s32 %s24, 1
      %s33 = sadd.s32 %s32, 1
      %p36 = scmp.eq.s32.totalorder %s24, 5
      %p37 = scmp.ne.s32.totalorder %s32, %s34
      %p38 = scmp.eq.s32.totalorder %s24, 0
      %p39 = por %p37, %p38
      %p40 = scmp.ne.s32.totalorder %s32, %s34
      %p41 = scmp.eq.s32.totalorder %s29, 5
      %p42 = por %p40, %p41
      %p43 = scmp.ne.s32.totalorder %s34, %s35
      %p44 = scmp.eq.s32.totalorder %s29, 0
      %p45 = por %p43, %p44
      %p46 = scmp.ne.s32.totalorder %s34, %s35
      %p47 = scmp.eq.s32.totalorder %s30, 5
      %p48 = por %p46, %p47
      %p50 = scmp.ne.s32.totalorder %s35, %s49
      %p51 = scmp.eq.s32.totalorder %s30, 0
      %p52 = por %p50, %p51
      %s53 = ssub.s32 %s24, %s31
      %p54 = scmp.eq.s32.totalorder %s53, 0
      %s56 = sadd.s32 %s55, 1
      %s57 = scalar_select %p54, %s55, %s56
      %p60 = pneg %p54
      %p61 = scmp.eq.s32.totalorder %s24, 5
      %p62 = por %p60, %p61
      %p63 = scmp.ne.s32.totalorder %s55, %s58
      %p64 = scmp.eq.s32.totalorder %s24, 0
      %p65 = por %p63, %p64
      %p66 = scmp.ne.s32.totalorder %s55, %s58
      %p67 = scmp.eq.s32.totalorder %s29, 5
      %p68 = por %p66, %p67
      %p69 = scmp.ne.s32.totalorder %s58, %s59
      %p70 = scmp.eq.s32.totalorder %s29, 0
      %p71 = por %p69, %p70
      %p72 = scmp.ne.s32.totalorder %s58, %s59
      %p73 = scmp.eq.s32.totalorder %s30, 5
      %p74 = por %p72, %p73
      %p76 = scmp.ne.s32.totalorder %s59, %s75
      %p77 = scmp.eq.s32.totalorder %s30, 0
      %p78 = por %p76, %p77
      %s79 = ssub.s32 %s24, %s31
      %p80 = scmp.eq.s32.totalorder %s79, 0
      %s82 = sadd.s32 %s81, 1
      %s83 = scalar_select %p80, %s81, %s82
      %p86 = pneg %p80
      %p87 = scmp.eq.s32.totalorder %s24, 5
      %p88 = por %p86, %p87
      %p89 = scmp.ne.s32.totalorder %s81, %s84
      %p90 = scmp.eq.s32.totalorder %s24, 0
      %p91 = por %p89, %p90
      %p92 = scmp.ne.s32.totalorder %s81, %s84
      %p93 = scmp.eq.s32.totalorder %s29, 5
      %p94 = por %p92, %p93
      %p95 = scmp.ne.s32.totalorder %s84, %s85
      %p96 = scmp.eq.s32.totalorder %s29, 0
      %p97 = por %p95, %p96
      %p98 = scmp.ne.s32.totalorder %s84, %s85
      %p99 = scmp.eq.s32.totalorder %s30, 5
      %p100 = por %p98, %p99
      %p102 = scmp.ne.s32.totalorder %s85, %s101
      %p103 = scmp.eq.s32.totalorder %s30, 0
      %p104 = por %p102, %p103
      %s105 = ssub.s32 %s24, %s31
      %p106 = scmp.eq.s32.totalorder %s105, 0
      %s108 = sadd.s32 %s107, 1
      %s109 = scalar_select %p106, %s107, %s108
      %p112 = pneg %p106
      %p113 = scmp.eq.s32.totalorder %s24, 5
      %p114 = por %p112, %p113
      %p115 = scmp.ne.s32.totalorder %s107, %s110
      %p116 = scmp.eq.s32.totalorder %s24, 0
      %p117 = por %p115, %p116
      %p118 = scmp.ne.s32.totalorder %s107, %s110
      %p119 = scmp.eq.s32.totalorder %s29, 5
      %p120 = por %p118, %p119
      %p121 = scmp.ne.s32.totalorder %s110, %s111
      %p122 = scmp.eq.s32.totalorder %s29, 0
      %p123 = por %p121, %p122
      %p124 = scmp.ne.s32.totalorder %s110, %s111
      %p125 = scmp.eq.s32.totalorder %s30, 5
      %p126 = por %p124, %p125
      %p128 = scmp.ne.s32.totalorder %s111, %s127
      %p129 = scmp.eq.s32.totalorder %s30, 0
      %p130 = por %p128, %p129
      %s131 = ssub.s32 %s24, %s31
      %p132 = scmp.eq.s32.totalorder %s131, 0
      %s134 = sadd.s32 %s133, 1
      %s135 = scalar_select %p132, %s133, %s134
      %p138 = pneg %p132
      %p139 = scmp.eq.s32.totalorder %s24, 5
      %p140 = por %p138, %p139
      %p141 = scmp.ne.s32.totalorder %s133, %s136
      %p142 = scmp.eq.s32.totalorder %s24, 0
      %p143 = por %p141, %p142
      %p144 = scmp.ne.s32.totalorder %s133, %s136
      %p145 = scmp.eq.s32.totalorder %s29, 5
      %p146 = por %p144, %p145
      %p147 = scmp.ne.s32.totalorder %s136, %s137
      %p148 = scmp.eq.s32.totalorder %s29, 0
      %p149 = por %p147, %p148
      %p150 = scmp.ne.s32.totalorder %s136, %s137
      %p151 = scmp.eq.s32.totalorder %s30, 5
      %p152 = por %p150, %p151
      %p154 = scmp.ne.s32.totalorder %s137, %s153
      %p155 = scmp.eq.s32.totalorder %s30, 0
      %p156 = por %p154, %p155
      %s157 = ssub.s32 %s24, %s31
      %p158 = scmp.eq.s32.totalorder %s157, 0
      %s160 = sadd.s32 %s159, 1
      %s161 = scalar_select %p158, %s159, %s160
      %p164 = pneg %p158
      %p165 = scmp.eq.s32.totalorder %s24, 5
      %p166 = por %p164, %p165
      %p167 = scmp.ne.s32.totalorder %s159, %s162
      %p168 = scmp.eq.s32.totalorder %s24, 0
      %p169 = por %p167, %p168
      %p170 = scmp.ne.s32.totalorder %s159, %s162
      %p171 = scmp.eq.s32.totalorder %s29, 5
      %p172 = por %p170, %p171
      %p173 = scmp.ne.s32.totalorder %s162, %s163
      %p174 = scmp.eq.s32.totalorder %s29, 0
      %p175 = por %p173, %p174
      %p176 = scmp.ne.s32.totalorder %s162, %s163
      %p177 = scmp.eq.s32.totalorder %s30, 5
      %p178 = por %p176, %p177
      %p180 = scmp.ne.s32.totalorder %s163, %s179
      %p181 = scmp.eq.s32.totalorder %s30, 0
      %p182 = por %p180, %p181
      %s183 = ssub.s32 %s24, %s31
      %p184 = scmp.eq.s32.totalorder %s183, 0
      %s186 = sadd.s32 %s185, 1
      %s187 = scalar_select %p184, %s185, %s186
      %p190 = pneg %p184
      %p191 = scmp.eq.s32.totalorder %s24, 5
      %p192 = por %p190, %p191
      %p193 = scmp.ne.s32.totalorder %s185, %s188
      %p194 = scmp.eq.s32.totalorder %s24, 0
      %p195 = por %p193, %p194
      %p196 = scmp.ne.s32.totalorder %s185, %s188
      %p197 = scmp.eq.s32.totalorder %s29, 5
      %p198 = por %p196, %p197
      %p199 = scmp.ne.s32.totalorder %s188, %s189
      %p200 = scmp.eq.s32.totalorder %s29, 0
      %p201 = por %p199, %p200
      %p202 = scmp.ne.s32.totalorder %s188, %s189
      %p203 = scmp.eq.s32.totalorder %s30, 5
      %p204 = por %p202, %p203
      %p206 = scmp.ne.s32.totalorder %s189, %s205
      %p207 = scmp.eq.s32.totalorder %s30, 0
      %p208 = por %p206, %p207
      %s209 = ssub.s32 %s24, %s31
      %p210 = scmp.eq.s32.totalorder %s209, 0
      %s212 = sadd.s32 %s211, 1
      %s213 = scalar_select %p210, %s211, %s212
      %p216 = pneg %p210
      %p217 = scmp.eq.s32.totalorder %s24, 5
      %p218 = por %p216, %p217
      %p219 = scmp.ne.s32.totalorder %s211, %s214
      %p220 = scmp.eq.s32.totalorder %s24, 0
      %p221 = por %p219, %p220
      %p222 = scmp.ne.s32.totalorder %s211, %s214
      %p223 = scmp.eq.s32.totalorder %s29, 5
      %p224 = por %p222, %p223
      %p225 = scmp.ne.s32.totalorder %s214, %s215
      %p226 = scmp.eq.s32.totalorder %s29, 0
      %p227 = por %p225, %p226
      %p228 = scmp.ne.s32.totalorder %s214, %s215
      %p229 = scmp.eq.s32.totalorder %s30, 5
      %p230 = por %p228, %p229
      %p232 = scmp.ne.s32.totalorder %s215, %s231
      %p233 = scmp.eq.s32.totalorder %s30, 0
      %p234 = por %p232, %p233
      %s235 = ssub.s32 %s24, %s31
      %p236 = scmp.eq.s32.totalorder %s235, 0
      %s238 = sadd.s32 %s237, 1
      %s239 = scalar_select %p236, %s237, %s238
      %p242 = pneg %p236
      %p243 = scmp.eq.s32.totalorder %s24, 5
      %p244 = por %p242, %p243
      %p245 = scmp.ne.s32.totalorder %s237, %s240
      %p246 = scmp.eq.s32.totalorder %s24, 0
      %p247 = por %p245, %p246
      %p248 = scmp.ne.s32.totalorder %s237, %s240
      %p249 = scmp.eq.s32.totalorder %s29, 5
      %p250 = por %p248, %p249
      %p251 = scmp.ne.s32.totalorder %s240, %s241
      %p252 = scmp.eq.s32.totalorder %s29, 0
      %p253 = por %p251, %p252
      %p254 = scmp.ne.s32.totalorder %s240, %s241
      %p255 = scmp.eq.s32.totalorder %s30, 5
      %p256 = por %p254, %p255
      %p258 = scmp.ne.s32.totalorder %s241, %s257
      %p259 = scmp.eq.s32.totalorder %s30, 0
      %p260 = por %p258, %p259
      %s261 = ssub.s32 %s24, %s31
      %p262 = scmp.eq.s32.totalorder %s261, 0
      %s264 = sadd.s32 %s263, 1
      %s265 = scalar_select %p262, %s263, %s264
      %p268 = pneg %p262
      %p269 = scmp.eq.s32.totalorder %s24, 5
      %p270 = por %p268, %p269
      %p271 = scmp.ne.s32.totalorder %s263, %s266
      %p272 = scmp.eq.s32.totalorder %s24, 0
      %p273 = por %p271, %p272
      %p274 = scmp.ne.s32.totalorder %s263, %s266
      %p275 = scmp.eq.s32.totalorder %s29, 5
      %p276 = por %p274, %p275
      %p277 = scmp.ne.s32.totalorder %s266, %s267
      %p278 = scmp.eq.s32.totalorder %s29, 0
      %p279 = por %p277, %p278
      %p280 = scmp.ne.s32.totalorder %s266, %s267
      %p281 = scmp.eq.s32.totalorder %s30, 5
      %p282 = por %p280, %p281
      %p284 = scmp.ne.s32.totalorder %s267, %s283
      %p285 = scmp.eq.s32.totalorder %s30, 0
      %p286 = por %p284, %p285
      %s287 = ssub.s32 %s24, %s31
      %p288 = scmp.eq.s32.totalorder %s287, 0
      %s290 = sadd.s32 %s289, 1
      %s291 = scalar_select %p288, %s289, %s290
      %p294 = pneg %p288
      %p295 = scmp.eq.s32.totalorder %s24, 5
      %p296 = por %p294, %p295
      %p297 = scmp.ne.s32.totalorder %s289, %s292
      %p298 = scmp.eq.s32.totalorder %s24, 0
      %p299 = por %p297, %p298
      %p300 = scmp.ne.s32.totalorder %s289, %s292
      %p301 = scmp.eq.s32.totalorder %s29, 5
      %p302 = por %p300, %p301
      %p303 = scmp.ne.s32.totalorder %s292, %s293
      %p304 = scmp.eq.s32.totalorder %s29, 0
      %p305 = por %p303, %p304
      %p306 = scmp.ne.s32.totalorder %s292, %s293
      %p307 = scmp.eq.s32.totalorder %s30, 5
      %p308 = por %p306, %p307
      %p310 = scmp.ne.s32.totalorder %s293, %s309
      %p311 = scmp.eq.s32.totalorder %s30, 0
      %p312 = por %p310, %p311
      %s313 = ssub.s32 %s24, %s31
      %p314 = scmp.eq.s32.totalorder %s313, 0
      %s316 = sadd.s32 %s315, 1
      %s317 = scalar_select %p314, %s315, %s316
      %p320 = pneg %p314
      %p321 = scmp.eq.s32.totalorder %s24, 5
      %p322 = por %p320, %p321
      %p323 = scmp.ne.s32.totalorder %s315, %s318
      %p324 = scmp.eq.s32.totalorder %s24, 0
      %p325 = por %p323, %p324
      %p326 = scmp.ne.s32.totalorder %s315, %s318
      %p327 = scmp.eq.s32.totalorder %s29, 5
      %p328 = por %p326, %p327
      %p329 = scmp.ne.s32.totalorder %s318, %s319
      %p330 = scmp.eq.s32.totalorder %s29, 0
      %p331 = por %p329, %p330
      %p332 = scmp.ne.s32.totalorder %s318, %s319
      %p333 = scmp.eq.s32.totalorder %s30, 5
      %p334 = por %p332, %p333
      %p336 = scmp.ne.s32.totalorder %s319, %s335
      %p337 = scmp.eq.s32.totalorder %s30, 0
      %p338 = por %p336, %p337
      %s339 = ssub.s32 %s24, %s31
      %p340 = scmp.eq.s32.totalorder %s339, 0
      %s342 = sadd.s32 %s341, 1
      %s343 = scalar_select %p340, %s341, %s342
      %p346 = pneg %p340
      %p347 = scmp.eq.s32.totalorder %s24, 5
      %p348 = por %p346, %p347
      %p349 = scmp.ne.s32.totalorder %s341, %s344
      %p350 = scmp.eq.s32.totalorder %s24, 0
      %p351 = por %p349, %p350
      %p352 = scmp.ne.s32.totalorder %s341, %s344
      %p353 = scmp.eq.s32.totalorder %s29, 5
      %p354 = por %p352, %p353
      %p355 = scmp.ne.s32.totalorder %s344, %s345
      %p356 = scmp.eq.s32.totalorder %s29, 0
      %p357 = por %p355, %p356
      %p358 = scmp.ne.s32.totalorder %s344, %s345
      %p359 = scmp.eq.s32.totalorder %s30, 5
      %p360 = por %p358, %p359
      %p362 = scmp.ne.s32.totalorder %s345, %s361
      %p363 = scmp.eq.s32.totalorder %s30, 0
      %p364 = por %p362, %p363
      %s366 = sadd.s32 %s365, 1
      %p369 = scmp.eq.s32.totalorder %s24, 5
      %p370 = scmp.ne.s32.totalorder %s365, %s367
      %p371 = scmp.eq.s32.totalorder %s24, 0
      %p372 = por %p370, %p371
      %p373 = scmp.ne.s32.totalorder %s365, %s367
      %p374 = scmp.eq.s32.totalorder %s29, 5
      %p375 = por %p373, %p374
      %p376 = scmp.ne.s32.totalorder %s367, %s368
      %p377 = scmp.eq.s32.totalorder %s29, 0
      %p378 = por %p376, %p377
      %p379 = scmp.ne.s32.totalorder %s367, %s368
      %p380 = scmp.eq.s32.totalorder %s30, 5
      %p381 = por %p379, %p380
      %p383 = scmp.ne.s32.totalorder %s368, %s382
      %p384 = scmp.eq.s32.totalorder %s30, 0
      %p385 = por %p383, %p384
      %p386 = scmp.le.s32.totalorder 1, %s24
      %p387 = scmp.lt.s32.totalorder %s24, 7
      %p388 = pnand %p386, %p387
      %p389 = pneg %p388
      // Predicated region
      $region9: #{transformer_encoder_jit.1} parent=5 // pred_check
        _
      $region10: #{transformer_encoder_jit.1} parent=5 // pred_check_branch
        %391 = sbr.rel (%p388) target = $region12
      $region11: #{transformer_encoder_jit.1} parent=5 // pred_region
        %s392 = ssub.s32 %s24, 1
        // Predicated region
        $region13: #{transformer_encoder_jit.1} parent=11 // pred_check
          %p393 = pneg %p45
        $region14: #{transformer_encoder_jit.1} parent=11 // pred_check_branch
          %395 = sbr.rel (%p393) target = $region16
        $region15: #{transformer_encoder_jit.1} parent=11 // pred_region
          %s397 = ssub.s32 256, 256
          %398 = vsyncadd [#allocation4], %s397
          %s399 = sshll.u32 [#allocation3], 4
          %s400 = int_to_ptr.vmem [resolvable:$true] %s399
          %405 = dma.hbm_to_vmem [thread:$0]  %s0, 256, %s400, [#allocation4], 128, 128, 8
        $region16: #{transformer_encoder_jit.1} parent=11 // pred_fallthru
          _
      $region12: #{transformer_encoder_jit.1} parent=5 // pred_fallthru
        _
      %p406 = scmp.lt.s32.totalorder %s24, 6
      // Predicated region
      $region17: #{transformer_encoder_jit.1} parent=5 // pred_check
        %p407 = pneg %p406
      $region18: #{transformer_encoder_jit.1} parent=5 // pred_check_branch
        %409 = sbr.rel (%p407) target = $region20
      $region19: #{transformer_encoder_jit.1} parent=5 // pred_region
        // Predicated region
        $region21: #{transformer_encoder_jit.1} parent=19 // pred_check
          %p410 = pneg %p65
        $region22: #{transformer_encoder_jit.1} parent=19 // pred_check_branch
          %412 = sbr.rel (%p410) target = $region24
        $region23: #{transformer_encoder_jit.1} parent=19 // pred_region
          %p413 = scmp.lt.s32.totalorder %s24, 5
          %s414 = scalar_select %p413, %s24, 5
          %s415 = smul.addr %s414, 4
          %s416 = smul.addr %s415, 8
          %s417 = scalar_lea.vmem %s1, %s416
        $region24: #{transformer_encoder_jit.1} parent=19 // pred_fallthru
          _
        // Predicated region
        $region25: #{transformer_encoder_jit.1} parent=19 // pred_check
          %p418 = pneg %p91
        $region26: #{transformer_encoder_jit.1} parent=19 // pred_check_branch
          %420 = sbr.rel (%p418) target = $region28
        $region27: #{transformer_encoder_jit.1} parent=19 // pred_region
          %p421 = scmp.lt.s32.totalorder %s24, 5
          %s422 = scalar_select %p421, %s24, 5
          %s423 = scalar_lea.vmem %s2, %s422
        $region28: #{transformer_encoder_jit.1} parent=19 // pred_fallthru
          _
        // Predicated region
        $region29: #{transformer_encoder_jit.1} parent=19 // pred_check
          %p424 = pneg %p117
        $region30: #{transformer_encoder_jit.1} parent=19 // pred_check_branch
          %426 = sbr.rel (%p424) target = $region32
        $region31: #{transformer_encoder_jit.1} parent=19 // pred_region
          %p427 = scmp.lt.s32.totalorder %s24, 5
          %s428 = scalar_select %p427, %s24, 5
          %s429 = smul.addr %s428, 4
          %s430 = smul.addr %s429, 8
          %s431 = scalar_lea.vmem %s3, %s430
        $region32: #{transformer_encoder_jit.1} parent=19 // pred_fallthru
          _
        // Predicated region
        $region33: #{transformer_encoder_jit.1} parent=19 // pred_check
          %p432 = pneg %p143
        $region34: #{transformer_encoder_jit.1} parent=19 // pred_check_branch
          %434 = sbr.rel (%p432) target = $region36
        $region35: #{transformer_encoder_jit.1} parent=19 // pred_region
          %p435 = scmp.lt.s32.totalorder %s24, 5
          %s436 = scalar_select %p435, %s24, 5
          %s437 = scalar_lea.vmem %s4, %s436
        $region36: #{transformer_encoder_jit.1} parent=19 // pred_fallthru
          _
        // Predicated region
        $region37: #{transformer_encoder_jit.1} parent=19 // pred_check
          %p438 = pneg %p169
        $region38: #{transformer_encoder_jit.1} parent=19 // pred_check_branch
          %440 = sbr.rel (%p438) target = $region40
        $region39: #{transformer_encoder_jit.1} parent=19 // pred_region
          %p441 = scmp.lt.s32.totalorder %s24, 5
          %s442 = scalar_select %p441, %s24, 5
          %s443 = smul.addr %s442, 4
          %s444 = smul.addr %s443, 8
          %s445 = scalar_lea.vmem %s5, %s444
        $region40: #{transformer_encoder_jit.1} parent=19 // pred_fallthru
          _
        // Predicated region
        $region41: #{transformer_encoder_jit.1} parent=19 // pred_check
          %p446 = pneg %p195
        $region42: #{transformer_encoder_jit.1} parent=19 // pred_check_branch
          %448 = sbr.rel (%p446) target = $region44
        $region43: #{transformer_encoder_jit.1} parent=19 // pred_region
          %p449 = scmp.lt.s32.totalorder %s24, 5
          %s450 = scalar_select %p449, %s24, 5
          %s451 = scalar_lea.vmem %s6, %s450
        $region44: #{transformer_encoder_jit.1} parent=19 // pred_fallthru
          _
        // Predicated region
        $region45: #{transformer_encoder_jit.1} parent=19 // pred_check
          %p452 = pneg %p221
        $region46: #{transformer_encoder_jit.1} parent=19 // pred_check_branch
          %454 = sbr.rel (%p452) target = $region48
        $region47: #{transformer_encoder_jit.1} parent=19 // pred_region
          %p455 = scmp.lt.s32.totalorder %s24, 5
          %s456 = scalar_select %p455, %s24, 5
          %s457 = smul.addr %s456, 8
          %s458 = smul.addr %s457, 8
          %s459 = scalar_lea.vmem %s7, %s458
        $region48: #{transformer_encoder_jit.1} parent=19 // pred_fallthru
          _
        // Predicated region
        $region49: #{transformer_encoder_jit.1} parent=19 // pred_check
          %p460 = pneg %p247
        $region50: #{transformer_encoder_jit.1} parent=19 // pred_check_branch
          %462 = sbr.rel (%p460) target = $region52
        $region51: #{transformer_encoder_jit.1} parent=19 // pred_region
          %p463 = scmp.lt.s32.totalorder %s24, 5
          %s464 = scalar_select %p463, %s24, 5
          %s465 = scalar_lea.vmem %s8, %s464
        $region52: #{transformer_encoder_jit.1} parent=19 // pred_fallthru
          _
        // Predicated region
        $region53: #{transformer_encoder_jit.1} parent=19 // pred_check
          %p466 = pneg %p273
        $region54: #{transformer_encoder_jit.1} parent=19 // pred_check_branch
          %468 = sbr.rel (%p466) target = $region56
        $region55: #{transformer_encoder_jit.1} parent=19 // pred_region
          %p469 = scmp.lt.s32.totalorder %s24, 5
          %s470 = scalar_select %p469, %s24, 5
          %s471 = scalar_lea.vmem %s9, %s470
        $region56: #{transformer_encoder_jit.1} parent=19 // pred_fallthru
          _
        // Predicated region
        $region57: #{transformer_encoder_jit.1} parent=19 // pred_check
          %p472 = pneg %p299
        $region58: #{transformer_encoder_jit.1} parent=19 // pred_check_branch
          %474 = sbr.rel (%p472) target = $region60
        $region59: #{transformer_encoder_jit.1} parent=19 // pred_region
          %p475 = scmp.lt.s32.totalorder %s24, 5
          %s476 = scalar_select %p475, %s24, 5
          %s477 = scalar_lea.vmem %s10, %s476
        $region60: #{transformer_encoder_jit.1} parent=19 // pred_fallthru
          _
        // Predicated region
        $region61: #{transformer_encoder_jit.1} parent=19 // pred_check
          %p478 = pneg %p325
        $region62: #{transformer_encoder_jit.1} parent=19 // pred_check_branch
          %480 = sbr.rel (%p478) target = $region64
        $region63: #{transformer_encoder_jit.1} parent=19 // pred_region
          %p481 = scmp.lt.s32.totalorder %s24, 5
          %s482 = scalar_select %p481, %s24, 5
          %s483 = scalar_lea.vmem %s11, %s482
        $region64: #{transformer_encoder_jit.1} parent=19 // pred_fallthru
          _
        // Predicated region
        $region65: #{transformer_encoder_jit.1} parent=19 // pred_check
          %p484 = pneg %p351
        $region66: #{transformer_encoder_jit.1} parent=19 // pred_check_branch
          %486 = sbr.rel (%p484) target = $region68
        $region67: #{transformer_encoder_jit.1} parent=19 // pred_region
          %s487 = sand.u32 %s341, 1
          %s488 = scalar_lea.sflag [#allocation7], %s487
          %s489 = sand.u32 %s341, 1
          %s490 = scalar_lea.vmem [#allocation6], %s489
          %s492 = ssub.s32 16, 16
          %493 = vsyncadd %s488, %s492
          %s494 = smul.addr %s24, 16
          %s495 = scalar_lea.hbm %s12, %s494
          %s497 = sshll.u32 %s490, 4
          %s498 = int_to_ptr.vmem [resolvable:$true] %s497
          %500 = dma.hbm_to_vmem [thread:$0]  %s495, 16, %s498, %s488
        $region68: #{transformer_encoder_jit.1} parent=19 // pred_fallthru
          _
      $region20: #{transformer_encoder_jit.1} parent=5 // pred_fallthru
        _
      %p501 = scmp.le.s32.totalorder 1, %s24
      %p502 = scmp.lt.s32.totalorder %s24, 7
      %p503 = pnand %p501, %p502
      %p504 = pneg %p503
      // Predicated region
      $region69: #{transformer_encoder_jit.1} parent=5 // pred_check
        _
      $region70: #{transformer_encoder_jit.1} parent=5 // pred_check_branch
        %506 = sbr.rel (%p503) target = $region72
      $region71: #{transformer_encoder_jit.1} parent=5 // pred_region
        %s507 = ssub.s32 %s24, 1
        // Predicated region
        $region73: #{transformer_encoder_jit.1} parent=71 // pred_check
          %p508 = pneg %p45
        $region74: #{transformer_encoder_jit.1} parent=71 // pred_check_branch
          %510 = sbr.rel (%p508) target = $region76
        $region75: #{transformer_encoder_jit.1} parent=71 // pred_region
          %511 = dma.done [#allocation4], 256
        $region76: #{transformer_encoder_jit.1} parent=71 // pred_fallthru
          _
        %s512 = sand.u32 %s344, 1
        %s513 = scalar_lea.sflag [#allocation7], %s512
        %s514 = sand.u32 %s344, 1
        %s515 = scalar_lea.vmem [#allocation6], %s514
        // Predicated region
        $region77: #{transformer_encoder_jit.1} parent=71 // pred_check
          %p516 = pneg %p357
        $region78: #{transformer_encoder_jit.1} parent=71 // pred_check_branch
          %518 = sbr.rel (%p516) target = $region80
        $region79: #{transformer_encoder_jit.1} parent=71 // pred_region
          %519 = dma.done %s513, 16
        $region80: #{transformer_encoder_jit.1} parent=71 // pred_fallthru
          _
        %p520 = pneg %p45
        %p521 = pneg %p42
        %p522 = scmp.lt.s32.totalorder %s29, 5
        %s523 = scalar_select %p522, %s29, 5
        %s524 = smul.addr %s523, 4
        %s525 = smul.addr %s524, 8
        %s526 = scalar_lea.vmem %s1, %s525
        %p527 = pneg %p71
        %p528 = pneg %p68
        %p529 = scmp.lt.s32.totalorder %s29, 5
        %s530 = scalar_select %p529, %s29, 5
        %s531 = scalar_lea.vmem %s2, %s530
        %p532 = pneg %p97
        %p533 = pneg %p94
        %p534 = scmp.lt.s32.totalorder %s29, 5
        %s535 = scalar_select %p534, %s29, 5
        %s536 = smul.addr %s535, 4
        %s537 = smul.addr %s536, 8
        %s538 = scalar_lea.vmem %s3, %s537
        %p539 = pneg %p123
        %p540 = pneg %p120
        %p541 = scmp.lt.s32.totalorder %s29, 5
        %s542 = scalar_select %p541, %s29, 5
        %s543 = scalar_lea.vmem %s4, %s542
        %p544 = pneg %p149
        %p545 = pneg %p146
        %p546 = scmp.lt.s32.totalorder %s29, 5
        %s547 = scalar_select %p546, %s29, 5
        %s548 = smul.addr %s547, 4
        %s549 = smul.addr %s548, 8
        %s550 = scalar_lea.vmem %s5, %s549
        %p551 = pneg %p175
        %p552 = pneg %p172
        %p553 = scmp.lt.s32.totalorder %s29, 5
        %s554 = scalar_select %p553, %s29, 5
        %s555 = scalar_lea.vmem %s6, %s554
        %p556 = pneg %p201
        %p557 = pneg %p198
        %p558 = scmp.lt.s32.totalorder %s29, 5
        %s559 = scalar_select %p558, %s29, 5
        %s560 = smul.addr %s559, 8
        %s561 = smul.addr %s560, 8
        %s562 = scalar_lea.vmem %s7, %s561
        %p563 = pneg %p227
        %p564 = pneg %p224
        %p565 = scmp.lt.s32.totalorder %s29, 5
        %s566 = scalar_select %p565, %s29, 5
        %s567 = scalar_lea.vmem %s8, %s566
        %p568 = pneg %p253
        %p569 = pneg %p250
        %p570 = scmp.lt.s32.totalorder %s29, 5
        %s571 = scalar_select %p570, %s29, 5
        %s572 = scalar_lea.vmem %s9, %s571
        %p573 = pneg %p279
        %p574 = pneg %p276
        %p575 = scmp.lt.s32.totalorder %s29, 5
        %s576 = scalar_select %p575, %s29, 5
        %s577 = scalar_lea.vmem %s10, %s576
        %p578 = pneg %p305
        %p579 = pneg %p302
        %p580 = scmp.lt.s32.totalorder %s29, 5
        %s581 = scalar_select %p580, %s29, 5
        %s582 = scalar_lea.vmem %s11, %s581
        %p583 = pneg %p331
        %p584 = pneg %p328
        %s585 = sand.u32 %s344, 1
        %s586 = scalar_lea.sflag [#allocation7], %s585
        %s587 = sand.u32 %s344, 1
        %s588 = scalar_lea.vmem [#allocation6], %s587
        %p589 = pneg %p357
        %p590 = pneg %p354
        %p591 = pneg %p378
        %p592 = pneg %p375
        %p593 = scmp.lt.s32.totalorder %s29, 5
        %s594 = scalar_select %p593, %s29, 5
        %s595 = smul.addr %s594, 4
        %s596 = smul.addr %s595, 8
        %s597 = scalar_lea.vmem %s1, %s596
        %p598 = scmp.lt.s32.totalorder %s29, 5
        %s599 = scalar_select %p598, %s29, 5
        %s600 = scalar_lea.vmem %s2, %s599
        %p601 = scmp.lt.s32.totalorder %s29, 5
        %s602 = scalar_select %p601, %s29, 5
        %s603 = smul.addr %s602, 4
        %s604 = smul.addr %s603, 8
        %s605 = scalar_lea.vmem %s3, %s604
        %p606 = scmp.lt.s32.totalorder %s29, 5
        %s607 = scalar_select %p606, %s29, 5
        %s608 = scalar_lea.vmem %s4, %s607
        %p609 = scmp.lt.s32.totalorder %s29, 5
        %s610 = scalar_select %p609, %s29, 5
        %s611 = smul.addr %s610, 4
        %s612 = smul.addr %s611, 8
        %s613 = scalar_lea.vmem %s5, %s612
        %p614 = scmp.lt.s32.totalorder %s29, 5
        %s615 = scalar_select %p614, %s29, 5
        %s616 = scalar_lea.vmem %s6, %s615
        %p617 = scmp.lt.s32.totalorder %s29, 5
        %s618 = scalar_select %p617, %s29, 5
        %s619 = smul.addr %s618, 8
        %s620 = smul.addr %s619, 8
        %s621 = scalar_lea.vmem %s7, %s620
        %p622 = scmp.lt.s32.totalorder %s29, 5
        %s623 = scalar_select %p622, %s29, 5
        %s624 = scalar_lea.vmem %s8, %s623
        %p625 = scmp.lt.s32.totalorder %s29, 5
        %s626 = scalar_select %p625, %s29, 5
        %s627 = scalar_lea.vmem %s9, %s626
        %p628 = scmp.lt.s32.totalorder %s29, 5
        %s629 = scalar_select %p628, %s29, 5
        %s630 = scalar_lea.vmem %s10, %s629
        %p631 = scmp.lt.s32.totalorder %s29, 5
        %s632 = scalar_select %p631, %s29, 5
        %s633 = scalar_lea.vmem %s11, %s632
        %p634 = scmp.eq.s32.totalorder %s29, 0
        // Predicated region
        $region81: #{transformer_encoder_jit.1} parent=71 // pred_check
          %p635 = pneg %p634
        $region82: #{transformer_encoder_jit.1} parent=71 // pred_check_branch
          %637 = sbr.rel (%p635) target = $region84
        $region83: #{transformer_encoder_jit.1} parent=71 // pred_region
          %v638 = vld [vmem:[#allocation3] sm:$0xff]
          %v639 = vld [vmem:[#allocation3 + $0x8] sm:$0xff]
          %vm640 = vcmask 261120
          %641 = vst.msk [vmem:[#allocation2] sm:$0xff] %vm640, %v638
          %642 = vst.msk [vmem:[#allocation2 + $0x8] sm:$0xff] %vm640, %v639
        $region84: #{transformer_encoder_jit.1} parent=71 // pred_fallthru
          _
        %v643 = vld [vmem:[#allocation2] sm:$0xff]
        %v644 = vld [vmem:[#allocation2 + $0x8] sm:$0xff]
        %v645 = vld [vmem:[%s597] sm:$0xff]
        %v646 = vld [vmem:[%s597 + $0x8] sm:$0xff]
        %v647 = vld [vmem:[%s597 + $0x10] sm:$0xff]
        %v648 = vld [vmem:[%s597 + $0x18] sm:$0xff]
        %v649 = vld [vmem:[%s600] sm:$0x1]
        %v651 = vlaneseq
        %v652 = vshrl.u32 %v651, 7
        %v653 = vsub.s32 0, %v652
        %v654 = vrot.slane %v649, %v653
        %vm656 = vcmask 261120
        %v658 = vsel %vm656, %v643, 0
        %v661 = vsel %vm656, %v644, 0
        %663 = vmatprep.subr.mxu0 0.0
        %664 = vmatpush1.msra.mxu0 %v645
        %665 = vmatprep.subr.mxu0 0.0
        %666 = vmatpush1.msra.mxu0 %v646
        %667 = vmatprep.subr.mxu0 0.0
        %668 = vmatpush1.msra.mxu0 %v647
        %669 = vmatprep.subr.mxu0 0.0
        %670 = vmatpush1.msra.mxu0 %v648
        %671 = vmatprep.subr.mxu0 0.0
        %672 = vmatpush1.msra.mxu0 0.0
        %673 = vmatprep.subr.mxu0 0.0
        %674 = vmatpush1.msra.mxu0 0.0
        %675 = vmatprep.subr.mxu0 0.0
        %676 = vmatpush1.msra.mxu0 0.0
        %677 = vmatprep.subr.mxu0 0.0
        %678 = vmatpush1.msra.mxu0 0.0
        %679 = vmatprep.subr.mxu0 0.0
        %680 = vmatpush1.msra.mxu0 0.0
        %681 = vmatprep.subr.mxu0 0.0
        %682 = vmatpush1.msra.mxu0 0.0
        %683 = vmatprep.subr.mxu0 0.0
        %684 = vmatpush1.msra.mxu0 0.0
        %685 = vmatprep.subr.mxu0 0.0
        %686 = vmatpush1.msra.mxu0 0.0
        %687 = vmatprep.subr.mxu0 0.0
        %688 = vmatpush1.msra.mxu0 0.0
        %689 = vmatprep.subr.mxu0 0.0
        %690 = vmatpush1.msra.mxu0 0.0
        %691 = vmatprep.subr.mxu0 0.0
        %692 = vmatpush1.msra.mxu0 0.0
        %693 = vmatprep.subr.mxu0 0.0
        %694 = vmatpush1.msra.mxu0 0.0
        %695 = vmatprep.subr.mxu0 0.0
        %696 = vmatpush1.msra.mxu0 0.0
        %697 = vmatprep.subr.mxu0 0.0
        %698 = vmatpush1.msra.mxu0 0.0
        %699 = vmatprep.subr.mxu0 0.0
        %700 = vmatpush1.msra.mxu0 0.0
        %701 = vmatprep.subr.mxu0 0.0
        %702 = vmatpush1.msra.mxu0 0.0
        %703 = vmatprep.subr.mxu0 0.0
        %704 = vmatpush1.msra.mxu0 0.0
        %705 = vmatprep.subr.mxu0 0.0
        %706 = vmatpush1.msra.mxu0 0.0
        %707 = vmatprep.subr.mxu0 0.0
        %708 = vmatpush1.msra.mxu0 0.0
        %709 = vmatprep.subr.mxu0 0.0
        %710 = vmatpush1.msra.mxu0 0.0
        %711 = vmatprep.subr.mxu0 0.0
        %712 = vmatpush1.msra.mxu0 0.0
        %713 = vmatprep.subr.mxu0 0.0
        %714 = vmatpush1.msra.mxu0 0.0
        %715 = vmatprep.subr.mxu0 0.0
        %716 = vmatpush1.msra.mxu0 0.0
        %717 = vmatprep.subr.mxu0 0.0
        %718 = vmatpush1.msra.mxu0 0.0
        %719 = vmatprep.subr.mxu0 0.0
        %720 = vmatpush1.msra.mxu0 0.0
        %721 = vmatprep.subr.mxu0 0.0
        %722 = vmatpush1.msra.mxu0 0.0
        %723 = vmatprep.subr.mxu0 0.0
        %724 = vmatpush1.msra.mxu0 0.0
        %725 = vmatprep.subr.mxu0 0.0
        %726 = vmatpush1.msra.mxu0 0.0
        %727 = vmatprep.mubr.f32.mxu0 0.0
        %728 = vmatmul.mubr.f32.gmra.mrb[0].mxu0 %v658
        %v729 = vpop.f32.mrb[0].mxu0
        %v730 = vadd.f32 %v654, %v729
        %v731 = vpop.f32.mrb[0].mxu0
        %732 = vmatprep.mubr.f32.mxu0 0.0
        %733 = vmatmul.mubr.f32.gmra.mrb[0].mxu0 %v661
        %v734 = vpop.f32.mrb[0].mxu0
        %v735 = vadd.f32 %v654, %v734
        %v736 = vpop.f32.mrb[0].mxu0
        %737 = vdwg.mxu0
        %739 = vrot.lane.b32.xlu0 %v730, 96
        %v740 = vpop.permute.xlu0 %739
        %vm741 = vcmask 64512
        %v742 = vsel %vm741, %v730, 0
        %v744 = vsel %vm741, %v740, 0
        %746 = vmatprep.subr.mxu0 0.0
        %747 = vmatpush1.xpose.msra.mxu0 %v744
        %748 = vmatprep.subr.mxu0 0.0
        %749 = vmatpush1.xpose.msra.mxu0 0.0
        %750 = vmatprep.subr.mxu0 0.0
        %751 = vmatpush1.xpose.msra.mxu0 0.0
        %752 = vmatprep.subr.mxu0 0.0
        %753 = vmatpush1.xpose.msra.mxu0 0.0
        %754 = vmatprep.subr.mxu0 0.0
        %755 = vmatpush1.xpose.msra.mxu0 0.0
        %756 = vmatprep.subr.mxu0 0.0
        %757 = vmatpush1.xpose.msra.mxu0 0.0
        %758 = vmatprep.subr.mxu0 0.0
        %759 = vmatpush1.xpose.msra.mxu0 0.0
        %760 = vmatprep.subr.mxu0 0.0
        %761 = vmatpush1.xpose.msra.mxu0 0.0
        %762 = vmatprep.subr.mxu0 0.0
        %763 = vmatpush1.xpose.msra.mxu0 0.0
        %764 = vmatprep.subr.mxu0 0.0
        %765 = vmatpush1.xpose.msra.mxu0 0.0
        %766 = vmatprep.subr.mxu0 0.0
        %767 = vmatpush1.xpose.msra.mxu0 0.0
        %768 = vmatprep.subr.mxu0 0.0
        %769 = vmatpush1.xpose.msra.mxu0 0.0
        %770 = vmatprep.subr.mxu0 0.0
        %771 = vmatpush1.xpose.msra.mxu0 0.0
        %772 = vmatprep.subr.mxu0 0.0
        %773 = vmatpush1.xpose.msra.mxu0 0.0
        %774 = vmatprep.subr.mxu0 0.0
        %775 = vmatpush1.xpose.msra.mxu0 0.0
        %776 = vmatprep.subr.mxu0 0.0
        %777 = vmatpush1.xpose.msra.mxu0 0.0
        %778 = vmatprep.subr.mxu0 0.0
        %779 = vmatpush1.xpose.msra.mxu0 0.0
        %780 = vmatprep.subr.mxu0 0.0
        %781 = vmatpush1.xpose.msra.mxu0 0.0
        %782 = vmatprep.subr.mxu0 0.0
        %783 = vmatpush1.xpose.msra.mxu0 0.0
        %784 = vmatprep.subr.mxu0 0.0
        %785 = vmatpush1.xpose.msra.mxu0 0.0
        %786 = vmatprep.subr.mxu0 0.0
        %787 = vmatpush1.xpose.msra.mxu0 0.0
        %788 = vmatprep.subr.mxu0 0.0
        %789 = vmatpush1.xpose.msra.mxu0 0.0
        %790 = vmatprep.subr.mxu0 0.0
        %791 = vmatpush1.xpose.msra.mxu0 0.0
        %792 = vmatprep.subr.mxu0 0.0
        %793 = vmatpush1.xpose.msra.mxu0 0.0
        %794 = vmatprep.subr.mxu0 0.0
        %795 = vmatpush1.xpose.msra.mxu0 0.0
        %796 = vmatprep.subr.mxu0 0.0
        %797 = vmatpush1.xpose.msra.mxu0 0.0
        %798 = vmatprep.subr.mxu0 0.0
        %799 = vmatpush1.xpose.msra.mxu0 0.0
        %800 = vmatprep.subr.mxu0 0.0
        %801 = vmatpush1.xpose.msra.mxu0 0.0
        %802 = vmatprep.subr.mxu0 0.0
        %803 = vmatpush1.xpose.msra.mxu0 0.0
        %804 = vmatprep.subr.mxu0 0.0
        %805 = vmatpush1.xpose.msra.mxu0 0.0
        %806 = vmatprep.subr.mxu0 0.0
        %807 = vmatpush1.xpose.msra.mxu0 0.0
        %808 = vmatprep.subr.mxu0 0.0
        %809 = vmatpush1.xpose.msra.mxu0 0.0
        %810 = vmatprep.mubr.f32.mxu0 0.0
        %811 = vmatmul.mubr.f32.gmra.mrb[0].mxu0 %v742
        %v812 = vpop.f32.mrb[0].mxu0
        %v813 = vadd.f32 0.0, %v812
        %v814 = vpop.f32.mrb[0].mxu0
        %815 = vdwg.mxu0
        %817 = vrot.lane.b32.xlu0 %v735, 96
        %v818 = vpop.permute.xlu0 %817
        %v819 = vsel %vm741, %v735, 0
        %v821 = vsel %vm741, %v818, 0
        %823 = vmatprep.subr.mxu0 0.0
        %824 = vmatpush1.xpose.msra.mxu0 %v821
        %825 = vmatprep.subr.mxu0 0.0
        %826 = vmatpush1.xpose.msra.mxu0 0.0
        %827 = vmatprep.subr.mxu0 0.0
        %828 = vmatpush1.xpose.msra.mxu0 0.0
        %829 = vmatprep.subr.mxu0 0.0
        %830 = vmatpush1.xpose.msra.mxu0 0.0
        %831 = vmatprep.subr.mxu0 0.0
        %832 = vmatpush1.xpose.msra.mxu0 0.0
        %833 = vmatprep.subr.mxu0 0.0
        %834 = vmatpush1.xpose.msra.mxu0 0.0
        %835 = vmatprep.subr.mxu0 0.0
        %836 = vmatpush1.xpose.msra.mxu0 0.0
        %837 = vmatprep.subr.mxu0 0.0
        %838 = vmatpush1.xpose.msra.mxu0 0.0
        %839 = vmatprep.subr.mxu0 0.0
        %840 = vmatpush1.xpose.msra.mxu0 0.0
        %841 = vmatprep.subr.mxu0 0.0
        %842 = vmatpush1.xpose.msra.mxu0 0.0
        %843 = vmatprep.subr.mxu0 0.0
        %844 = vmatpush1.xpose.msra.mxu0 0.0
        %845 = vmatprep.subr.mxu0 0.0
        %846 = vmatpush1.xpose.msra.mxu0 0.0
        %847 = vmatprep.subr.mxu0 0.0
        %848 = vmatpush1.xpose.msra.mxu0 0.0
        %849 = vmatprep.subr.mxu0 0.0
        %850 = vmatpush1.xpose.msra.mxu0 0.0
        %851 = vmatprep.subr.mxu0 0.0
        %852 = vmatpush1.xpose.msra.mxu0 0.0
        %853 = vmatprep.subr.mxu0 0.0
        %854 = vmatpush1.xpose.msra.mxu0 0.0
        %855 = vmatprep.subr.mxu0 0.0
        %856 = vmatpush1.xpose.msra.mxu0 0.0
        %857 = vmatprep.subr.mxu0 0.0
        %858 = vmatpush1.xpose.msra.mxu0 0.0
        %859 = vmatprep.subr.mxu0 0.0
        %860 = vmatpush1.xpose.msra.mxu0 0.0
        %861 = vmatprep.subr.mxu0 0.0
        %862 = vmatpush1.xpose.msra.mxu0 0.0
        %863 = vmatprep.subr.mxu0 0.0
        %864 = vmatpush1.xpose.msra.mxu0 0.0
        %865 = vmatprep.subr.mxu0 0.0
        %866 = vmatpush1.xpose.msra.mxu0 0.0
        %867 = vmatprep.subr.mxu0 0.0
        %868 = vmatpush1.xpose.msra.mxu0 0.0
        %869 = vmatprep.subr.mxu0 0.0
        %870 = vmatpush1.xpose.msra.mxu0 0.0
        %871 = vmatprep.subr.mxu0 0.0
        %872 = vmatpush1.xpose.msra.mxu0 0.0
        %873 = vmatprep.subr.mxu0 0.0
        %874 = vmatpush1.xpose.msra.mxu0 0.0
        %875 = vmatprep.subr.mxu0 0.0
        %876 = vmatpush1.xpose.msra.mxu0 0.0
        %877 = vmatprep.subr.mxu0 0.0
        %878 = vmatpush1.xpose.msra.mxu0 0.0
        %879 = vmatprep.subr.mxu0 0.0
        %880 = vmatpush1.xpose.msra.mxu0 0.0
        %881 = vmatprep.subr.mxu0 0.0
        %882 = vmatpush1.xpose.msra.mxu0 0.0
        %883 = vmatprep.subr.mxu0 0.0
        %884 = vmatpush1.xpose.msra.mxu0 0.0
        %885 = vmatprep.subr.mxu0 0.0
        %886 = vmatpush1.xpose.msra.mxu0 0.0
        %887 = vmatprep.mubr.f32.mxu0 0.0
        %888 = vmatmul.mubr.f32.gmra.mrb[0].mxu0 %v819
        %v889 = vpop.f32.mrb[0].mxu0
        %v890 = vadd.f32 0.0, %v889
        %v891 = vpop.f32.mrb[0].mxu0
        %892 = vdwg.mxu0
        %v893 = vsel %vm741, %v813, -inf
        %894 = vmax.xlane.f32.xlu0 %v893
        %v895 = vpop.xlane.xlu0 %894
        %v896 = vsel %vm741, %v890, -inf
        %897 = vmax.xlane.f32.xlu0 %v896
        %v898 = vpop.xlane.xlu0 %897
        %v899 = vsub.f32 %v813, %v895
        %v900 = vsub.f32 %v890, %v898
        %v901 = vmul.f32 %v899, 1.442695
        %v902 = vpow.pop %v901
        %v903 = vmul.f32 %v900, 1.442695
        %v904 = vpow.pop %v903
        %v905 = vsel %vm741, %v902, 0.0
        %906 = vadd.xlane.f32.xlu0 %v905
        %v907 = vpop.xlane.xlu0 %906
        %v908 = vsel %vm741, %v904, 0.0
        %909 = vadd.xlane.f32.xlu0 %v908
        %v910 = vpop.xlane.xlu0 %909
        %v911 = vrcp.pop %v907
        %v912 = vmul.f32 %v902, %v911
        %v913 = vrcp.pop %v910
        %v914 = vmul.f32 %v904, %v913
        %915 = vrot.lane.b32.xlu0 %v730, 64
        %v916 = vpop.permute.xlu0 %915
        %v919 = vsel %vm741, %v912, 0
        %921 = vmatprep.subr.mxu0 0.0
        %922 = vmatpush1.msra.mxu0 %v916
        %923 = vmatprep.subr.mxu0 0.0
        %924 = vmatpush1.msra.mxu0 0.0
        %925 = vmatprep.subr.mxu0 0.0
        %926 = vmatpush1.msra.mxu0 0.0
        %927 = vmatprep.subr.mxu0 0.0
        %928 = vmatpush1.msra.mxu0 0.0
        %929 = vmatprep.subr.mxu0 0.0
        %930 = vmatpush1.msra.mxu0 0.0
        %931 = vmatprep.subr.mxu0 0.0
        %932 = vmatpush1.msra.mxu0 0.0
        %933 = vmatprep.subr.mxu0 0.0
        %934 = vmatpush1.msra.mxu0 0.0
        %935 = vmatprep.subr.mxu0 0.0
        %936 = vmatpush1.msra.mxu0 0.0
        %937 = vmatprep.subr.mxu0 0.0
        %938 = vmatpush1.msra.mxu0 0.0
        %939 = vmatprep.subr.mxu0 0.0
        %940 = vmatpush1.msra.mxu0 0.0
        %941 = vmatprep.subr.mxu0 0.0
        %942 = vmatpush1.msra.mxu0 0.0
        %943 = vmatprep.subr.mxu0 0.0
        %944 = vmatpush1.msra.mxu0 0.0
        %945 = vmatprep.subr.mxu0 0.0
        %946 = vmatpush1.msra.mxu0 0.0
        %947 = vmatprep.subr.mxu0 0.0
        %948 = vmatpush1.msra.mxu0 0.0
        %949 = vmatprep.subr.mxu0 0.0
        %950 = vmatpush1.msra.mxu0 0.0
        %951 = vmatprep.subr.mxu0 0.0
        %952 = vmatpush1.msra.mxu0 0.0
        %953 = vmatprep.subr.mxu0 0.0
        %954 = vmatpush1.msra.mxu0 0.0
        %955 = vmatprep.subr.mxu0 0.0
        %956 = vmatpush1.msra.mxu0 0.0
        %957 = vmatprep.subr.mxu0 0.0
        %958 = vmatpush1.msra.mxu0 0.0
        %959 = vmatprep.subr.mxu0 0.0
        %960 = vmatpush1.msra.mxu0 0.0
        %961 = vmatprep.subr.mxu0 0.0
        %962 = vmatpush1.msra.mxu0 0.0
        %963 = vmatprep.subr.mxu0 0.0
        %964 = vmatpush1.msra.mxu0 0.0
        %965 = vmatprep.subr.mxu0 0.0
        %966 = vmatpush1.msra.mxu0 0.0
        %967 = vmatprep.subr.mxu0 0.0
        %968 = vmatpush1.msra.mxu0 0.0
        %969 = vmatprep.subr.mxu0 0.0
        %970 = vmatpush1.msra.mxu0 0.0
        %971 = vmatprep.subr.mxu0 0.0
        %972 = vmatpush1.msra.mxu0 0.0
        %973 = vmatprep.subr.mxu0 0.0
        %974 = vmatpush1.msra.mxu0 0.0
        %975 = vmatprep.subr.mxu0 0.0
        %976 = vmatpush1.msra.mxu0 0.0
        %977 = vmatprep.subr.mxu0 0.0
        %978 = vmatpush1.msra.mxu0 0.0
        %979 = vmatprep.subr.mxu0 0.0
        %980 = vmatpush1.msra.mxu0 0.0
        %981 = vmatprep.subr.mxu0 0.0
        %982 = vmatpush1.msra.mxu0 0.0
        %983 = vmatprep.subr.mxu0 0.0
        %984 = vmatpush1.msra.mxu0 0.0
        %985 = vmatprep.mubr.f32.mxu0 0.0
        %986 = vmatmul.mubr.f32.gmra.mrb[0].mxu0 %v919
        %v987 = vpop.f32.mrb[0].mxu0
        %v988 = vadd.f32 0.0, %v987
        %v989 = vpop.f32.mrb[0].mxu0
        %990 = vdwg.mxu0
        %991 = vrot.lane.b32.xlu0 %v735, 64
        %v992 = vpop.permute.xlu0 %991
        %v995 = vsel %vm741, %v914, 0
        %997 = vmatprep.subr.mxu0 0.0
        %998 = vmatpush1.msra.mxu0 %v992
        %999 = vmatprep.subr.mxu0 0.0
        %1000 = vmatpush1.msra.mxu0 0.0
        %1001 = vmatprep.subr.mxu0 0.0
        %1002 = vmatpush1.msra.mxu0 0.0
        %1003 = vmatprep.subr.mxu0 0.0
        %1004 = vmatpush1.msra.mxu0 0.0
        %1005 = vmatprep.subr.mxu0 0.0
        %1006 = vmatpush1.msra.mxu0 0.0
        %1007 = vmatprep.subr.mxu0 0.0
        %1008 = vmatpush1.msra.mxu0 0.0
        %1009 = vmatprep.subr.mxu0 0.0
        %1010 = vmatpush1.msra.mxu0 0.0
        %1011 = vmatprep.subr.mxu0 0.0
        %1012 = vmatpush1.msra.mxu0 0.0
        %1013 = vmatprep.subr.mxu0 0.0
        %1014 = vmatpush1.msra.mxu0 0.0
        %1015 = vmatprep.subr.mxu0 0.0
        %1016 = vmatpush1.msra.mxu0 0.0
        %1017 = vmatprep.subr.mxu0 0.0
        %1018 = vmatpush1.msra.mxu0 0.0
        %1019 = vmatprep.subr.mxu0 0.0
        %1020 = vmatpush1.msra.mxu0 0.0
        %1021 = vmatprep.subr.mxu0 0.0
        %1022 = vmatpush1.msra.mxu0 0.0
        %1023 = vmatprep.subr.mxu0 0.0
        %1024 = vmatpush1.msra.mxu0 0.0
        %1025 = vmatprep.subr.mxu0 0.0
        %1026 = vmatpush1.msra.mxu0 0.0
        %1027 = vmatprep.subr.mxu0 0.0
        %1028 = vmatpush1.msra.mxu0 0.0
        %1029 = vmatprep.subr.mxu0 0.0
        %1030 = vmatpush1.msra.mxu0 0.0
        %1031 = vmatprep.subr.mxu0 0.0
        %1032 = vmatpush1.msra.mxu0 0.0
        %1033 = vmatprep.subr.mxu0 0.0
        %1034 = vmatpush1.msra.mxu0 0.0
        %1035 = vmatprep.subr.mxu0 0.0
        %1036 = vmatpush1.msra.mxu0 0.0
        %1037 = vmatprep.subr.mxu0 0.0
        %1038 = vmatpush1.msra.mxu0 0.0
        %1039 = vmatprep.subr.mxu0 0.0
        %1040 = vmatpush1.msra.mxu0 0.0
        %1041 = vmatprep.subr.mxu0 0.0
        %1042 = vmatpush1.msra.mxu0 0.0
        %1043 = vmatprep.subr.mxu0 0.0
        %1044 = vmatpush1.msra.mxu0 0.0
        %1045 = vmatprep.subr.mxu0 0.0
        %1046 = vmatpush1.msra.mxu0 0.0
        %1047 = vmatprep.subr.mxu0 0.0
        %1048 = vmatpush1.msra.mxu0 0.0
        %1049 = vmatprep.subr.mxu0 0.0
        %1050 = vmatpush1.msra.mxu0 0.0
        %1051 = vmatprep.subr.mxu0 0.0
        %1052 = vmatpush1.msra.mxu0 0.0
        %1053 = vmatprep.subr.mxu0 0.0
        %1054 = vmatpush1.msra.mxu0 0.0
        %1055 = vmatprep.subr.mxu0 0.0
        %1056 = vmatpush1.msra.mxu0 0.0
        %1057 = vmatprep.subr.mxu0 0.0
        %1058 = vmatpush1.msra.mxu0 0.0
        %1059 = vmatprep.subr.mxu0 0.0
        %1060 = vmatpush1.msra.mxu0 0.0
        %1061 = vmatprep.mubr.f32.mxu0 0.0
        %1062 = vmatmul.mubr.f32.gmra.mrb[0].mxu0 %v995
        %v1063 = vpop.f32.mrb[0].mxu0
        %v1064 = vadd.f32 0.0, %v1063
        %v1065 = vpop.f32.mrb[0].mxu0
        %1066 = vdwg.mxu0
        %1067 = vrot.lane.b32.xlu0 %v730, 120
        %v1068 = vpop.permute.xlu0 %1067
        %1069 = vrot.lane.b32.xlu0 %v730, 88
        %v1070 = vpop.permute.xlu0 %1069
        %v1071 = vsel %vm741, %v1068, 0
        %v1073 = vsel %vm741, %v1070, 0
        %1075 = vmatprep.subr.mxu0 0.0
        %1076 = vmatpush1.xpose.msra.mxu0 %v1073
        %1077 = vmatprep.subr.mxu0 0.0
        %1078 = vmatpush1.xpose.msra.mxu0 0.0
        %1079 = vmatprep.subr.mxu0 0.0
        %1080 = vmatpush1.xpose.msra.mxu0 0.0
        %1081 = vmatprep.subr.mxu0 0.0
        %1082 = vmatpush1.xpose.msra.mxu0 0.0
        %1083 = vmatprep.subr.mxu0 0.0
        %1084 = vmatpush1.xpose.msra.mxu0 0.0
        %1085 = vmatprep.subr.mxu0 0.0
        %1086 = vmatpush1.xpose.msra.mxu0 0.0
        %1087 = vmatprep.subr.mxu0 0.0
        %1088 = vmatpush1.xpose.msra.mxu0 0.0
        %1089 = vmatprep.subr.mxu0 0.0
        %1090 = vmatpush1.xpose.msra.mxu0 0.0
        %1091 = vmatprep.subr.mxu0 0.0
        %1092 = vmatpush1.xpose.msra.mxu0 0.0
        %1093 = vmatprep.subr.mxu0 0.0
        %1094 = vmatpush1.xpose.msra.mxu0 0.0
        %1095 = vmatprep.subr.mxu0 0.0
        %1096 = vmatpush1.xpose.msra.mxu0 0.0
        %1097 = vmatprep.subr.mxu0 0.0
        %1098 = vmatpush1.xpose.msra.mxu0 0.0
        %1099 = vmatprep.subr.mxu0 0.0
        %1100 = vmatpush1.xpose.msra.mxu0 0.0
        %1101 = vmatprep.subr.mxu0 0.0
        %1102 = vmatpush1.xpose.msra.mxu0 0.0
        %1103 = vmatprep.subr.mxu0 0.0
        %1104 = vmatpush1.xpose.msra.mxu0 0.0
        %1105 = vmatprep.subr.mxu0 0.0
        %1106 = vmatpush1.xpose.msra.mxu0 0.0
        %1107 = vmatprep.subr.mxu0 0.0
        %1108 = vmatpush1.xpose.msra.mxu0 0.0
        %1109 = vmatprep.subr.mxu0 0.0
        %1110 = vmatpush1.xpose.msra.mxu0 0.0
        %1111 = vmatprep.subr.mxu0 0.0
        %1112 = vmatpush1.xpose.msra.mxu0 0.0
        %1113 = vmatprep.subr.mxu0 0.0
        %1114 = vmatpush1.xpose.msra.mxu0 0.0
        %1115 = vmatprep.subr.mxu0 0.0
        %1116 = vmatpush1.xpose.msra.mxu0 0.0
        %1117 = vmatprep.subr.mxu0 0.0
        %1118 = vmatpush1.xpose.msra.mxu0 0.0
        %1119 = vmatprep.subr.mxu0 0.0
        %1120 = vmatpush1.xpose.msra.mxu0 0.0
        %1121 = vmatprep.subr.mxu0 0.0
        %1122 = vmatpush1.xpose.msra.mxu0 0.0
        %1123 = vmatprep.subr.mxu0 0.0
        %1124 = vmatpush1.xpose.msra.mxu0 0.0
        %1125 = vmatprep.subr.mxu0 0.0
        %1126 = vmatpush1.xpose.msra.mxu0 0.0
        %1127 = vmatprep.subr.mxu0 0.0
        %1128 = vmatpush1.xpose.msra.mxu0 0.0
        %1129 = vmatprep.subr.mxu0 0.0
        %1130 = vmatpush1.xpose.msra.mxu0 0.0
        %1131 = vmatprep.subr.mxu0 0.0
        %1132 = vmatpush1.xpose.msra.mxu0 0.0
        %1133 = vmatprep.subr.mxu0 0.0
        %1134 = vmatpush1.xpose.msra.mxu0 0.0
        %1135 = vmatprep.subr.mxu0 0.0
        %1136 = vmatpush1.xpose.msra.mxu0 0.0
        %1137 = vmatprep.subr.mxu0 0.0
        %1138 = vmatpush1.xpose.msra.mxu0 0.0
        %1139 = vmatprep.mubr.f32.mxu0 0.0
        %1140 = vmatmul.mubr.f32.gmra.mrb[0].mxu0 %v1071
        %v1141 = vpop.f32.mrb[0].mxu0
        %v1142 = vadd.f32 0.0, %v1141
        %v1143 = vpop.f32.mrb[0].mxu0
        %1144 = vdwg.mxu0
        %1145 = vrot.lane.b32.xlu0 %v735, 120
        %v1146 = vpop.permute.xlu0 %1145
        %1147 = vrot.lane.b32.xlu0 %v735, 88
        %v1148 = vpop.permute.xlu0 %1147
        %v1149 = vsel %vm741, %v1146, 0
        %v1151 = vsel %vm741, %v1148, 0
        %1153 = vmatprep.subr.mxu0 0.0
        %1154 = vmatpush1.xpose.msra.mxu0 %v1151
        %1155 = vmatprep.subr.mxu0 0.0
        %1156 = vmatpush1.xpose.msra.mxu0 0.0
        %1157 = vmatprep.subr.mxu0 0.0
        %1158 = vmatpush1.xpose.msra.mxu0 0.0
        %1159 = vmatprep.subr.mxu0 0.0
        %1160 = vmatpush1.xpose.msra.mxu0 0.0
        %1161 = vmatprep.subr.mxu0 0.0
        %1162 = vmatpush1.xpose.msra.mxu0 0.0
        %1163 = vmatprep.subr.mxu0 0.0
        %1164 = vmatpush1.xpose.msra.mxu0 0.0
        %1165 = vmatprep.subr.mxu0 0.0
        %1166 = vmatpush1.xpose.msra.mxu0 0.0
        %1167 = vmatprep.subr.mxu0 0.0
        %1168 = vmatpush1.xpose.msra.mxu0 0.0
        %1169 = vmatprep.subr.mxu0 0.0
        %1170 = vmatpush1.xpose.msra.mxu0 0.0
        %1171 = vmatprep.subr.mxu0 0.0
        %1172 = vmatpush1.xpose.msra.mxu0 0.0
        %1173 = vmatprep.subr.mxu0 0.0
        %1174 = vmatpush1.xpose.msra.mxu0 0.0
        %1175 = vmatprep.subr.mxu0 0.0
        %1176 = vmatpush1.xpose.msra.mxu0 0.0
        %1177 = vmatprep.subr.mxu0 0.0
        %1178 = vmatpush1.xpose.msra.mxu0 0.0
        %1179 = vmatprep.subr.mxu0 0.0
        %1180 = vmatpush1.xpose.msra.mxu0 0.0
        %1181 = vmatprep.subr.mxu0 0.0
        %1182 = vmatpush1.xpose.msra.mxu0 0.0
        %1183 = vmatprep.subr.mxu0 0.0
        %1184 = vmatpush1.xpose.msra.mxu0 0.0
        %1185 = vmatprep.subr.mxu0 0.0
        %1186 = vmatpush1.xpose.msra.mxu0 0.0
        %1187 = vmatprep.subr.mxu0 0.0
        %1188 = vmatpush1.xpose.msra.mxu0 0.0
        %1189 = vmatprep.subr.mxu0 0.0
        %1190 = vmatpush1.xpose.msra.mxu0 0.0
        %1191 = vmatprep.subr.mxu0 0.0
        %1192 = vmatpush1.xpose.msra.mxu0 0.0
        %1193 = vmatprep.subr.mxu0 0.0
        %1194 = vmatpush1.xpose.msra.mxu0 0.0
        %1195 = vmatprep.subr.mxu0 0.0
        %1196 = vmatpush1.xpose.msra.mxu0 0.0
        %1197 = vmatprep.subr.mxu0 0.0
        %1198 = vmatpush1.xpose.msra.mxu0 0.0
        %1199 = vmatprep.subr.mxu0 0.0
        %1200 = vmatpush1.xpose.msra.mxu0 0.0
        %1201 = vmatprep.subr.mxu0 0.0
        %1202 = vmatpush1.xpose.msra.mxu0 0.0
        %1203 = vmatprep.subr.mxu0 0.0
        %1204 = vmatpush1.xpose.msra.mxu0 0.0
        %1205 = vmatprep.subr.mxu0 0.0
        %1206 = vmatpush1.xpose.msra.mxu0 0.0
        %1207 = vmatprep.subr.mxu0 0.0
        %1208 = vmatpush1.xpose.msra.mxu0 0.0
        %1209 = vmatprep.subr.mxu0 0.0
        %1210 = vmatpush1.xpose.msra.mxu0 0.0
        %1211 = vmatprep.subr.mxu0 0.0
        %1212 = vmatpush1.xpose.msra.mxu0 0.0
        %1213 = vmatprep.subr.mxu0 0.0
        %1214 = vmatpush1.xpose.msra.mxu0 0.0
        %1215 = vmatprep.subr.mxu0 0.0
        %1216 = vmatpush1.xpose.msra.mxu0 0.0
        %1217 = vmatprep.mubr.f32.mxu0 0.0
        %1218 = vmatmul.mubr.f32.gmra.mrb[0].mxu0 %v1149
        %v1219 = vpop.f32.mrb[0].mxu0
        %v1220 = vadd.f32 0.0, %v1219
        %v1221 = vpop.f32.mrb[0].mxu0
        %1222 = vdwg.mxu0
        %v1223 = vsel %vm741, %v1142, -inf
        %1224 = vmax.xlane.f32.xlu0 %v1223
        %v1225 = vpop.xlane.xlu0 %1224
        %v1226 = vsel %vm741, %v1220, -inf
        %1227 = vmax.xlane.f32.xlu0 %v1226
        %v1228 = vpop.xlane.xlu0 %1227
        %v1229 = vsub.f32 %v1142, %v1225
        %v1230 = vsub.f32 %v1220, %v1228
        %v1231 = vmul.f32 %v1229, 1.442695
        %v1232 = vpow.pop %v1231
        %v1233 = vmul.f32 %v1230, 1.442695
        %v1234 = vpow.pop %v1233
        %v1235 = vsel %vm741, %v1232, 0.0
        %1236 = vadd.xlane.f32.xlu0 %v1235
        %v1237 = vpop.xlane.xlu0 %1236
        %v1238 = vsel %vm741, %v1234, 0.0
        %1239 = vadd.xlane.f32.xlu0 %v1238
        %v1240 = vpop.xlane.xlu0 %1239
        %v1241 = vrcp.pop %v1237
        %v1242 = vmul.f32 %v1232, %v1241
        %v1243 = vrcp.pop %v1240
        %v1244 = vmul.f32 %v1234, %v1243
        %1245 = vrot.lane.b32.xlu0 %v730, 56
        %v1246 = vpop.permute.xlu0 %1245
        %v1249 = vsel %vm741, %v1242, 0
        %1251 = vmatprep.subr.mxu0 0.0
        %1252 = vmatpush1.msra.mxu0 %v1246
        %1253 = vmatprep.subr.mxu0 0.0
        %1254 = vmatpush1.msra.mxu0 0.0
        %1255 = vmatprep.subr.mxu0 0.0
        %1256 = vmatpush1.msra.mxu0 0.0
        %1257 = vmatprep.subr.mxu0 0.0
        %1258 = vmatpush1.msra.mxu0 0.0
        %1259 = vmatprep.subr.mxu0 0.0
        %1260 = vmatpush1.msra.mxu0 0.0
        %1261 = vmatprep.subr.mxu0 0.0
        %1262 = vmatpush1.msra.mxu0 0.0
        %1263 = vmatprep.subr.mxu0 0.0
        %1264 = vmatpush1.msra.mxu0 0.0
        %1265 = vmatprep.subr.mxu0 0.0
        %1266 = vmatpush1.msra.mxu0 0.0
        %1267 = vmatprep.subr.mxu0 0.0
        %1268 = vmatpush1.msra.mxu0 0.0
        %1269 = vmatprep.subr.mxu0 0.0
        %1270 = vmatpush1.msra.mxu0 0.0
        %1271 = vmatprep.subr.mxu0 0.0
        %1272 = vmatpush1.msra.mxu0 0.0
        %1273 = vmatprep.subr.mxu0 0.0
        %1274 = vmatpush1.msra.mxu0 0.0
        %1275 = vmatprep.subr.mxu0 0.0
        %1276 = vmatpush1.msra.mxu0 0.0
        %1277 = vmatprep.subr.mxu0 0.0
        %1278 = vmatpush1.msra.mxu0 0.0
        %1279 = vmatprep.subr.mxu0 0.0
        %1280 = vmatpush1.msra.mxu0 0.0
        %1281 = vmatprep.subr.mxu0 0.0
        %1282 = vmatpush1.msra.mxu0 0.0
        %1283 = vmatprep.subr.mxu0 0.0
        %1284 = vmatpush1.msra.mxu0 0.0
        %1285 = vmatprep.subr.mxu0 0.0
        %1286 = vmatpush1.msra.mxu0 0.0
        %1287 = vmatprep.subr.mxu0 0.0
        %1288 = vmatpush1.msra.mxu0 0.0
        %1289 = vmatprep.subr.mxu0 0.0
        %1290 = vmatpush1.msra.mxu0 0.0
        %1291 = vmatprep.subr.mxu0 0.0
        %1292 = vmatpush1.msra.mxu0 0.0
        %1293 = vmatprep.subr.mxu0 0.0
        %1294 = vmatpush1.msra.mxu0 0.0
        %1295 = vmatprep.subr.mxu0 0.0
        %1296 = vmatpush1.msra.mxu0 0.0
        %1297 = vmatprep.subr.mxu0 0.0
        %1298 = vmatpush1.msra.mxu0 0.0
        %1299 = vmatprep.subr.mxu0 0.0
        %1300 = vmatpush1.msra.mxu0 0.0
        %1301 = vmatprep.subr.mxu0 0.0
        %1302 = vmatpush1.msra.mxu0 0.0
        %1303 = vmatprep.subr.mxu0 0.0
        %1304 = vmatpush1.msra.mxu0 0.0
        %1305 = vmatprep.subr.mxu0 0.0
        %1306 = vmatpush1.msra.mxu0 0.0
        %1307 = vmatprep.subr.mxu0 0.0
        %1308 = vmatpush1.msra.mxu0 0.0
        %1309 = vmatprep.subr.mxu0 0.0
        %1310 = vmatpush1.msra.mxu0 0.0
        %1311 = vmatprep.subr.mxu0 0.0
        %1312 = vmatpush1.msra.mxu0 0.0
        %1313 = vmatprep.subr.mxu0 0.0
        %1314 = vmatpush1.msra.mxu0 0.0
        %1315 = vmatprep.mubr.f32.mxu0 0.0
        %1316 = vmatmul.mubr.f32.gmra.mrb[0].mxu0 %v1249
        %v1317 = vpop.f32.mrb[0].mxu0
        %v1318 = vadd.f32 0.0, %v1317
        %v1319 = vpop.f32.mrb[0].mxu0
        %1320 = vdwg.mxu0
        %1321 = vrot.lane.b32.xlu0 %v735, 56
        %v1322 = vpop.permute.xlu0 %1321
        %v1325 = vsel %vm741, %v1244, 0
        %1327 = vmatprep.subr.mxu0 0.0
        %1328 = vmatpush1.msra.mxu0 %v1322
        %1329 = vmatprep.subr.mxu0 0.0
        %1330 = vmatpush1.msra.mxu0 0.0
        %1331 = vmatprep.subr.mxu0 0.0
        %1332 = vmatpush1.msra.mxu0 0.0
        %1333 = vmatprep.subr.mxu0 0.0
        %1334 = vmatpush1.msra.mxu0 0.0
        %1335 = vmatprep.subr.mxu0 0.0
        %1336 = vmatpush1.msra.mxu0 0.0
        %1337 = vmatprep.subr.mxu0 0.0
        %1338 = vmatpush1.msra.mxu0 0.0
        %1339 = vmatprep.subr.mxu0 0.0
        %1340 = vmatpush1.msra.mxu0 0.0
        %1341 = vmatprep.subr.mxu0 0.0
        %1342 = vmatpush1.msra.mxu0 0.0
        %1343 = vmatprep.subr.mxu0 0.0
        %1344 = vmatpush1.msra.mxu0 0.0
        %1345 = vmatprep.subr.mxu0 0.0
        %1346 = vmatpush1.msra.mxu0 0.0
        %1347 = vmatprep.subr.mxu0 0.0
        %1348 = vmatpush1.msra.mxu0 0.0
        %1349 = vmatprep.subr.mxu0 0.0
        %1350 = vmatpush1.msra.mxu0 0.0
        %1351 = vmatprep.subr.mxu0 0.0
        %1352 = vmatpush1.msra.mxu0 0.0
        %1353 = vmatprep.subr.mxu0 0.0
        %1354 = vmatpush1.msra.mxu0 0.0
        %1355 = vmatprep.subr.mxu0 0.0
        %1356 = vmatpush1.msra.mxu0 0.0
        %1357 = vmatprep.subr.mxu0 0.0
        %1358 = vmatpush1.msra.mxu0 0.0
        %1359 = vmatprep.subr.mxu0 0.0
        %1360 = vmatpush1.msra.mxu0 0.0
        %1361 = vmatprep.subr.mxu0 0.0
        %1362 = vmatpush1.msra.mxu0 0.0
        %1363 = vmatprep.subr.mxu0 0.0
        %1364 = vmatpush1.msra.mxu0 0.0
        %1365 = vmatprep.subr.mxu0 0.0
        %1366 = vmatpush1.msra.mxu0 0.0
        %1367 = vmatprep.subr.mxu0 0.0
        %1368 = vmatpush1.msra.mxu0 0.0
        %1369 = vmatprep.subr.mxu0 0.0
        %1370 = vmatpush1.msra.mxu0 0.0
        %1371 = vmatprep.subr.mxu0 0.0
        %1372 = vmatpush1.msra.mxu0 0.0
        %1373 = vmatprep.subr.mxu0 0.0
        %1374 = vmatpush1.msra.mxu0 0.0
        %1375 = vmatprep.subr.mxu0 0.0
        %1376 = vmatpush1.msra.mxu0 0.0
        %1377 = vmatprep.subr.mxu0 0.0
        %1378 = vmatpush1.msra.mxu0 0.0
        %1379 = vmatprep.subr.mxu0 0.0
        %1380 = vmatpush1.msra.mxu0 0.0
        %1381 = vmatprep.subr.mxu0 0.0
        %1382 = vmatpush1.msra.mxu0 0.0
        %1383 = vmatprep.subr.mxu0 0.0
        %1384 = vmatpush1.msra.mxu0 0.0
        %1385 = vmatprep.subr.mxu0 0.0
        %1386 = vmatpush1.msra.mxu0 0.0
        %1387 = vmatprep.subr.mxu0 0.0
        %1388 = vmatpush1.msra.mxu0 0.0
        %1389 = vmatprep.subr.mxu0 0.0
        %1390 = vmatpush1.msra.mxu0 0.0
        %1391 = vmatprep.mubr.f32.mxu0 0.0
        %1392 = vmatmul.mubr.f32.gmra.mrb[0].mxu0 %v1325
        %v1393 = vpop.f32.mrb[0].mxu0
        %v1394 = vadd.f32 0.0, %v1393
        %v1395 = vpop.f32.mrb[0].mxu0
        %1396 = vdwg.mxu0
        %1397 = vrot.lane.b32.xlu0 %v730, 112
        %v1398 = vpop.permute.xlu0 %1397
        %1399 = vrot.lane.b32.xlu0 %v730, 80
        %v1400 = vpop.permute.xlu0 %1399
        %v1401 = vsel %vm741, %v1398, 0
        %v1403 = vsel %vm741, %v1400, 0
        %1405 = vmatprep.subr.mxu0 0.0
        %1406 = vmatpush1.xpose.msra.mxu0 %v1403
        %1407 = vmatprep.subr.mxu0 0.0
        %1408 = vmatpush1.xpose.msra.mxu0 0.0
        %1409 = vmatprep.subr.mxu0 0.0
        %1410 = vmatpush1.xpose.msra.mxu0 0.0
        %1411 = vmatprep.subr.mxu0 0.0
        %1412 = vmatpush1.xpose.msra.mxu0 0.0
        %1413 = vmatprep.subr.mxu0 0.0
        %1414 = vmatpush1.xpose.msra.mxu0 0.0
        %1415 = vmatprep.subr.mxu0 0.0
        %1416 = vmatpush1.xpose.msra.mxu0 0.0
        %1417 = vmatprep.subr.mxu0 0.0
        %1418 = vmatpush1.xpose.msra.mxu0 0.0
        %1419 = vmatprep.subr.mxu0 0.0
        %1420 = vmatpush1.xpose.msra.mxu0 0.0
        %1421 = vmatprep.subr.mxu0 0.0
        %1422 = vmatpush1.xpose.msra.mxu0 0.0
        %1423 = vmatprep.subr.mxu0 0.0
        %1424 = vmatpush1.xpose.msra.mxu0 0.0
        %1425 = vmatprep.subr.mxu0 0.0
        %1426 = vmatpush1.xpose.msra.mxu0 0.0
        %1427 = vmatprep.subr.mxu0 0.0
        %1428 = vmatpush1.xpose.msra.mxu0 0.0
        %1429 = vmatprep.subr.mxu0 0.0
        %1430 = vmatpush1.xpose.msra.mxu0 0.0
        %1431 = vmatprep.subr.mxu0 0.0
        %1432 = vmatpush1.xpose.msra.mxu0 0.0
        %1433 = vmatprep.subr.mxu0 0.0
        %1434 = vmatpush1.xpose.msra.mxu0 0.0
        %1435 = vmatprep.subr.mxu0 0.0
        %1436 = vmatpush1.xpose.msra.mxu0 0.0
        %1437 = vmatprep.subr.mxu0 0.0
        %1438 = vmatpush1.xpose.msra.mxu0 0.0
        %1439 = vmatprep.subr.mxu0 0.0
        %1440 = vmatpush1.xpose.msra.mxu0 0.0
        %1441 = vmatprep.subr.mxu0 0.0
        %1442 = vmatpush1.xpose.msra.mxu0 0.0
        %1443 = vmatprep.subr.mxu0 0.0
        %1444 = vmatpush1.xpose.msra.mxu0 0.0
        %1445 = vmatprep.subr.mxu0 0.0
        %1446 = vmatpush1.xpose.msra.mxu0 0.0
        %1447 = vmatprep.subr.mxu0 0.0
        %1448 = vmatpush1.xpose.msra.mxu0 0.0
        %1449 = vmatprep.subr.mxu0 0.0
        %1450 = vmatpush1.xpose.msra.mxu0 0.0
        %1451 = vmatprep.subr.mxu0 0.0
        %1452 = vmatpush1.xpose.msra.mxu0 0.0
        %1453 = vmatprep.subr.mxu0 0.0
        %1454 = vmatpush1.xpose.msra.mxu0 0.0
        %1455 = vmatprep.subr.mxu0 0.0
        %1456 = vmatpush1.xpose.msra.mxu0 0.0
        %1457 = vmatprep.subr.mxu0 0.0
        %1458 = vmatpush1.xpose.msra.mxu0 0.0
        %1459 = vmatprep.subr.mxu0 0.0
        %1460 = vmatpush1.xpose.msra.mxu0 0.0
        %1461 = vmatprep.subr.mxu0 0.0
        %1462 = vmatpush1.xpose.msra.mxu0 0.0
        %1463 = vmatprep.subr.mxu0 0.0
        %1464 = vmatpush1.xpose.msra.mxu0 0.0
        %1465 = vmatprep.subr.mxu0 0.0
        %1466 = vmatpush1.xpose.msra.mxu0 0.0
        %1467 = vmatprep.subr.mxu0 0.0
        %1468 = vmatpush1.xpose.msra.mxu0 0.0
        %1469 = vmatprep.mubr.f32.mxu0 0.0
        %1470 = vmatmul.mubr.f32.gmra.mrb[0].mxu0 %v1401
        %v1471 = vpop.f32.mrb[0].mxu0
        %v1472 = vadd.f32 0.0, %v1471
        %v1473 = vpop.f32.mrb[0].mxu0
        %1474 = vdwg.mxu0
        %1475 = vrot.lane.b32.xlu0 %v735, 112
        %v1476 = vpop.permute.xlu0 %1475
        %1477 = vrot.lane.b32.xlu0 %v735, 80
        %v1478 = vpop.permute.xlu0 %1477
        %v1479 = vsel %vm741, %v1476, 0
        %v1481 = vsel %vm741, %v1478, 0
        %1483 = vmatprep.subr.mxu0 0.0
        %1484 = vmatpush1.xpose.msra.mxu0 %v1481
        %1485 = vmatprep.subr.mxu0 0.0
        %1486 = vmatpush1.xpose.msra.mxu0 0.0
        %1487 = vmatprep.subr.mxu0 0.0
        %1488 = vmatpush1.xpose.msra.mxu0 0.0
        %1489 = vmatprep.subr.mxu0 0.0
        %1490 = vmatpush1.xpose.msra.mxu0 0.0
        %1491 = vmatprep.subr.mxu0 0.0
        %1492 = vmatpush1.xpose.msra.mxu0 0.0
        %1493 = vmatprep.subr.mxu0 0.0
        %1494 = vmatpush1.xpose.msra.mxu0 0.0
        %1495 = vmatprep.subr.mxu0 0.0
        %1496 = vmatpush1.xpose.msra.mxu0 0.0
        %1497 = vmatprep.subr.mxu0 0.0
        %1498 = vmatpush1.xpose.msra.mxu0 0.0
        %1499 = vmatprep.subr.mxu0 0.0
        %1500 = vmatpush1.xpose.msra.mxu0 0.0
        %1501 = vmatprep.subr.mxu0 0.0
        %1502 = vmatpush1.xpose.msra.mxu0 0.0
        %1503 = vmatprep.subr.mxu0 0.0
        %1504 = vmatpush1.xpose.msra.mxu0 0.0
        %1505 = vmatprep.subr.mxu0 0.0
        %1506 = vmatpush1.xpose.msra.mxu0 0.0
        %1507 = vmatprep.subr.mxu0 0.0
        %1508 = vmatpush1.xpose.msra.mxu0 0.0
        %1509 = vmatprep.subr.mxu0 0.0
        %1510 = vmatpush1.xpose.msra.mxu0 0.0
        %1511 = vmatprep.subr.mxu0 0.0
        %1512 = vmatpush1.xpose.msra.mxu0 0.0
        %1513 = vmatprep.subr.mxu0 0.0
        %1514 = vmatpush1.xpose.msra.mxu0 0.0
        %1515 = vmatprep.subr.mxu0 0.0
        %1516 = vmatpush1.xpose.msra.mxu0 0.0
        %1517 = vmatprep.subr.mxu0 0.0
        %1518 = vmatpush1.xpose.msra.mxu0 0.0
        %1519 = vmatprep.subr.mxu0 0.0
        %1520 = vmatpush1.xpose.msra.mxu0 0.0
        %1521 = vmatprep.subr.mxu0 0.0
        %1522 = vmatpush1.xpose.msra.mxu0 0.0
        %1523 = vmatprep.subr.mxu0 0.0
        %1524 = vmatpush1.xpose.msra.mxu0 0.0
        %1525 = vmatprep.subr.mxu0 0.0
        %1526 = vmatpush1.xpose.msra.mxu0 0.0
        %1527 = vmatprep.subr.mxu0 0.0
        %1528 = vmatpush1.xpose.msra.mxu0 0.0
        %1529 = vmatprep.subr.mxu0 0.0
        %1530 = vmatpush1.xpose.msra.mxu0 0.0
        %1531 = vmatprep.subr.mxu0 0.0
        %1532 = vmatpush1.xpose.msra.mxu0 0.0
        %1533 = vmatprep.subr.mxu0 0.0
        %1534 = vmatpush1.xpose.msra.mxu0 0.0
        %1535 = vmatprep.subr.mxu0 0.0
        %1536 = vmatpush1.xpose.msra.mxu0 0.0
        %1537 = vmatprep.subr.mxu0 0.0
        %1538 = vmatpush1.xpose.msra.mxu0 0.0
        %1539 = vmatprep.subr.mxu0 0.0
        %1540 = vmatpush1.xpose.msra.mxu0 0.0
        %1541 = vmatprep.subr.mxu0 0.0
        %1542 = vmatpush1.xpose.msra.mxu0 0.0
        %1543 = vmatprep.subr.mxu0 0.0
        %1544 = vmatpush1.xpose.msra.mxu0 0.0
        %1545 = vmatprep.subr.mxu0 0.0
        %1546 = vmatpush1.xpose.msra.mxu0 0.0
        %1547 = vmatprep.mubr.f32.mxu0 0.0
        %1548 = vmatmul.mubr.f32.gmra.mrb[0].mxu0 %v1479
        %v1549 = vpop.f32.mrb[0].mxu0
        %v1550 = vadd.f32 0.0, %v1549
        %v1551 = vpop.f32.mrb[0].mxu0
        %1552 = vdwg.mxu0
        %v1553 = vsel %vm741, %v1472, -inf
        %1554 = vmax.xlane.f32.xlu0 %v1553
        %v1555 = vpop.xlane.xlu0 %1554
        %v1556 = vsel %vm741, %v1550, -inf
        %1557 = vmax.xlane.f32.xlu0 %v1556
        %v1558 = vpop.xlane.xlu0 %1557
        %v1559 = vsub.f32 %v1472, %v1555
        %v1560 = vsub.f32 %v1550, %v1558
        %v1561 = vmul.f32 %v1559, 1.442695
        %v1562 = vpow.pop %v1561
        %v1563 = vmul.f32 %v1560, 1.442695
        %v1564 = vpow.pop %v1563
        %v1565 = vsel %vm741, %v1562, 0.0
        %1566 = vadd.xlane.f32.xlu0 %v1565
        %v1567 = vpop.xlane.xlu0 %1566
        %v1568 = vsel %vm741, %v1564, 0.0
        %1569 = vadd.xlane.f32.xlu0 %v1568
        %v1570 = vpop.xlane.xlu0 %1569
        %v1571 = vrcp.pop %v1567
        %v1572 = vmul.f32 %v1562, %v1571
        %v1573 = vrcp.pop %v1570
        %v1574 = vmul.f32 %v1564, %v1573
        %1575 = vrot.lane.b32.xlu0 %v730, 48
        %v1576 = vpop.permute.xlu0 %1575
        %v1579 = vsel %vm741, %v1572, 0
        %1581 = vmatprep.subr.mxu0 0.0
        %1582 = vmatpush1.msra.mxu0 %v1576
        %1583 = vmatprep.subr.mxu0 0.0
        %1584 = vmatpush1.msra.mxu0 0.0
        %1585 = vmatprep.subr.mxu0 0.0
        %1586 = vmatpush1.msra.mxu0 0.0
        %1587 = vmatprep.subr.mxu0 0.0
        %1588 = vmatpush1.msra.mxu0 0.0
        %1589 = vmatprep.subr.mxu0 0.0
        %1590 = vmatpush1.msra.mxu0 0.0
        %1591 = vmatprep.subr.mxu0 0.0
        %1592 = vmatpush1.msra.mxu0 0.0
        %1593 = vmatprep.subr.mxu0 0.0
        %1594 = vmatpush1.msra.mxu0 0.0
        %1595 = vmatprep.subr.mxu0 0.0
        %1596 = vmatpush1.msra.mxu0 0.0
        %1597 = vmatprep.subr.mxu0 0.0
        %1598 = vmatpush1.msra.mxu0 0.0
        %1599 = vmatprep.subr.mxu0 0.0
        %1600 = vmatpush1.msra.mxu0 0.0
        %1601 = vmatprep.subr.mxu0 0.0
        %1602 = vmatpush1.msra.mxu0 0.0
        %1603 = vmatprep.subr.mxu0 0.0
        %1604 = vmatpush1.msra.mxu0 0.0
        %1605 = vmatprep.subr.mxu0 0.0
        %1606 = vmatpush1.msra.mxu0 0.0
        %1607 = vmatprep.subr.mxu0 0.0
        %1608 = vmatpush1.msra.mxu0 0.0
        %1609 = vmatprep.subr.mxu0 0.0
        %1610 = vmatpush1.msra.mxu0 0.0
        %1611 = vmatprep.subr.mxu0 0.0
        %1612 = vmatpush1.msra.mxu0 0.0
        %1613 = vmatprep.subr.mxu0 0.0
        %1614 = vmatpush1.msra.mxu0 0.0
        %1615 = vmatprep.subr.mxu0 0.0
        %1616 = vmatpush1.msra.mxu0 0.0
        %1617 = vmatprep.subr.mxu0 0.0
        %1618 = vmatpush1.msra.mxu0 0.0
        %1619 = vmatprep.subr.mxu0 0.0
        %1620 = vmatpush1.msra.mxu0 0.0
        %1621 = vmatprep.subr.mxu0 0.0
        %1622 = vmatpush1.msra.mxu0 0.0
        %1623 = vmatprep.subr.mxu0 0.0
        %1624 = vmatpush1.msra.mxu0 0.0
        %1625 = vmatprep.subr.mxu0 0.0
        %1626 = vmatpush1.msra.mxu0 0.0
        %1627 = vmatprep.subr.mxu0 0.0
        %1628 = vmatpush1.msra.mxu0 0.0
        %1629 = vmatprep.subr.mxu0 0.0
        %1630 = vmatpush1.msra.mxu0 0.0
        %1631 = vmatprep.subr.mxu0 0.0
        %1632 = vmatpush1.msra.mxu0 0.0
        %1633 = vmatprep.subr.mxu0 0.0
        %1634 = vmatpush1.msra.mxu0 0.0
        %1635 = vmatprep.subr.mxu0 0.0
        %1636 = vmatpush1.msra.mxu0 0.0
        %1637 = vmatprep.subr.mxu0 0.0
        %1638 = vmatpush1.msra.mxu0 0.0
        %1639 = vmatprep.subr.mxu0 0.0
        %1640 = vmatpush1.msra.mxu0 0.0
        %1641 = vmatprep.subr.mxu0 0.0
        %1642 = vmatpush1.msra.mxu0 0.0
        %1643 = vmatprep.subr.mxu0 0.0
        %1644 = vmatpush1.msra.mxu0 0.0
        %1645 = vmatprep.mubr.f32.mxu0 0.0
        %1646 = vmatmul.mubr.f32.gmra.mrb[0].mxu0 %v1579
        %v1647 = vpop.f32.mrb[0].mxu0
        %v1648 = vadd.f32 0.0, %v1647
        %v1649 = vpop.f32.mrb[0].mxu0
        %1650 = vdwg.mxu0
        %1651 = vrot.lane.b32.xlu0 %v735, 48
        %v1652 = vpop.permute.xlu0 %1651
        %v1655 = vsel %vm741, %v1574, 0
        %1657 = vmatprep.subr.mxu0 0.0
        %1658 = vmatpush1.msra.mxu0 %v1652
        %1659 = vmatprep.subr.mxu0 0.0
        %1660 = vmatpush1.msra.mxu0 0.0
        %1661 = vmatprep.subr.mxu0 0.0
        %1662 = vmatpush1.msra.mxu0 0.0
        %1663 = vmatprep.subr.mxu0 0.0
        %1664 = vmatpush1.msra.mxu0 0.0
        %1665 = vmatprep.subr.mxu0 0.0
        %1666 = vmatpush1.msra.mxu0 0.0
        %1667 = vmatprep.subr.mxu0 0.0
        %1668 = vmatpush1.msra.mxu0 0.0
        %1669 = vmatprep.subr.mxu0 0.0
        %1670 = vmatpush1.msra.mxu0 0.0
        %1671 = vmatprep.subr.mxu0 0.0
        %1672 = vmatpush1.msra.mxu0 0.0
        %1673 = vmatprep.subr.mxu0 0.0
        %1674 = vmatpush1.msra.mxu0 0.0
        %1675 = vmatprep.subr.mxu0 0.0
        %1676 = vmatpush1.msra.mxu0 0.0
        %1677 = vmatprep.subr.mxu0 0.0
        %1678 = vmatpush1.msra.mxu0 0.0
        %1679 = vmatprep.subr.mxu0 0.0
        %1680 = vmatpush1.msra.mxu0 0.0
        %1681 = vmatprep.subr.mxu0 0.0
        %1682 = vmatpush1.msra.mxu0 0.0
        %1683 = vmatprep.subr.mxu0 0.0
        %1684 = vmatpush1.msra.mxu0 0.0
        %1685 = vmatprep.subr.mxu0 0.0
        %1686 = vmatpush1.msra.mxu0 0.0
        %1687 = vmatprep.subr.mxu0 0.0
        %1688 = vmatpush1.msra.mxu0 0.0
        %1689 = vmatprep.subr.mxu0 0.0
        %1690 = vmatpush1.msra.mxu0 0.0
        %1691 = vmatprep.subr.mxu0 0.0
        %1692 = vmatpush1.msra.mxu0 0.0
        %1693 = vmatprep.subr.mxu0 0.0
        %1694 = vmatpush1.msra.mxu0 0.0
        %1695 = vmatprep.subr.mxu0 0.0
        %1696 = vmatpush1.msra.mxu0 0.0
        %1697 = vmatprep.subr.mxu0 0.0
        %1698 = vmatpush1.msra.mxu0 0.0
        %1699 = vmatprep.subr.mxu0 0.0
        %1700 = vmatpush1.msra.mxu0 0.0
        %1701 = vmatprep.subr.mxu0 0.0
        %1702 = vmatpush1.msra.mxu0 0.0
        %1703 = vmatprep.subr.mxu0 0.0
        %1704 = vmatpush1.msra.mxu0 0.0
        %1705 = vmatprep.subr.mxu0 0.0
        %1706 = vmatpush1.msra.mxu0 0.0
        %1707 = vmatprep.subr.mxu0 0.0
        %1708 = vmatpush1.msra.mxu0 0.0
        %1709 = vmatprep.subr.mxu0 0.0
        %1710 = vmatpush1.msra.mxu0 0.0
        %1711 = vmatprep.subr.mxu0 0.0
        %1712 = vmatpush1.msra.mxu0 0.0
        %1713 = vmatprep.subr.mxu0 0.0
        %1714 = vmatpush1.msra.mxu0 0.0
        %1715 = vmatprep.subr.mxu0 0.0
        %1716 = vmatpush1.msra.mxu0 0.0
        %1717 = vmatprep.subr.mxu0 0.0
        %1718 = vmatpush1.msra.mxu0 0.0
        %1719 = vmatprep.subr.mxu0 0.0
        %1720 = vmatpush1.msra.mxu0 0.0
        %1721 = vmatprep.mubr.f32.mxu0 0.0
        %1722 = vmatmul.mubr.f32.gmra.mrb[0].mxu0 %v1655
        %v1723 = vpop.f32.mrb[0].mxu0
        %v1724 = vadd.f32 0.0, %v1723
        %v1725 = vpop.f32.mrb[0].mxu0
        %1726 = vdwg.mxu0
        %1727 = vrot.lane.b32.xlu0 %v730, 104
        %v1728 = vpop.permute.xlu0 %1727
        %1729 = vrot.lane.b32.xlu0 %v730, 72
        %v1730 = vpop.permute.xlu0 %1729
        %v1731 = vsel %vm741, %v1728, 0
        %v1733 = vsel %vm741, %v1730, 0
        %1735 = vmatprep.subr.mxu0 0.0
        %1736 = vmatpush1.xpose.msra.mxu0 %v1733
        %1737 = vmatprep.subr.mxu0 0.0
        %1738 = vmatpush1.xpose.msra.mxu0 0.0
        %1739 = vmatprep.subr.mxu0 0.0
        %1740 = vmatpush1.xpose.msra.mxu0 0.0
        %1741 = vmatprep.subr.mxu0 0.0
        %1742 = vmatpush1.xpose.msra.mxu0 0.0
        %1743 = vmatprep.subr.mxu0 0.0
        %1744 = vmatpush1.xpose.msra.mxu0 0.0
        %1745 = vmatprep.subr.mxu0 0.0
        %1746 = vmatpush1.xpose.msra.mxu0 0.0
        %1747 = vmatprep.subr.mxu0 0.0
        %1748 = vmatpush1.xpose.msra.mxu0 0.0
        %1749 = vmatprep.subr.mxu0 0.0
        %1750 = vmatpush1.xpose.msra.mxu0 0.0
        %1751 = vmatprep.subr.mxu0 0.0
        %1752 = vmatpush1.xpose.msra.mxu0 0.0
        %1753 = vmatprep.subr.mxu0 0.0
        %1754 = vmatpush1.xpose.msra.mxu0 0.0
        %1755 = vmatprep.subr.mxu0 0.0
        %1756 = vmatpush1.xpose.msra.mxu0 0.0
        %1757 = vmatprep.subr.mxu0 0.0
        %1758 = vmatpush1.xpose.msra.mxu0 0.0
        %1759 = vmatprep.subr.mxu0 0.0
        %1760 = vmatpush1.xpose.msra.mxu0 0.0
        %1761 = vmatprep.subr.mxu0 0.0
        %1762 = vmatpush1.xpose.msra.mxu0 0.0
        %1763 = vmatprep.subr.mxu0 0.0
        %1764 = vmatpush1.xpose.msra.mxu0 0.0
        %1765 = vmatprep.subr.mxu0 0.0
        %1766 = vmatpush1.xpose.msra.mxu0 0.0
        %1767 = vmatprep.subr.mxu0 0.0
        %1768 = vmatpush1.xpose.msra.mxu0 0.0
        %1769 = vmatprep.subr.mxu0 0.0
        %1770 = vmatpush1.xpose.msra.mxu0 0.0
        %1771 = vmatprep.subr.mxu0 0.0
        %1772 = vmatpush1.xpose.msra.mxu0 0.0
        %1773 = vmatprep.subr.mxu0 0.0
        %1774 = vmatpush1.xpose.msra.mxu0 0.0
        %1775 = vmatprep.subr.mxu0 0.0
        %1776 = vmatpush1.xpose.msra.mxu0 0.0
        %1777 = vmatprep.subr.mxu0 0.0
        %1778 = vmatpush1.xpose.msra.mxu0 0.0
        %1779 = vmatprep.subr.mxu0 0.0
        %1780 = vmatpush1.xpose.msra.mxu0 0.0
        %1781 = vmatprep.subr.mxu0 0.0
        %1782 = vmatpush1.xpose.msra.mxu0 0.0
        %1783 = vmatprep.subr.mxu0 0.0
        %1784 = vmatpush1.xpose.msra.mxu0 0.0
        %1785 = vmatprep.subr.mxu0 0.0
        %1786 = vmatpush1.xpose.msra.mxu0 0.0
        %1787 = vmatprep.subr.mxu0 0.0
        %1788 = vmatpush1.xpose.msra.mxu0 0.0
        %1789 = vmatprep.subr.mxu0 0.0
        %1790 = vmatpush1.xpose.msra.mxu0 0.0
        %1791 = vmatprep.subr.mxu0 0.0
        %1792 = vmatpush1.xpose.msra.mxu0 0.0
        %1793 = vmatprep.subr.mxu0 0.0
        %1794 = vmatpush1.xpose.msra.mxu0 0.0
        %1795 = vmatprep.subr.mxu0 0.0
        %1796 = vmatpush1.xpose.msra.mxu0 0.0
        %1797 = vmatprep.subr.mxu0 0.0
        %1798 = vmatpush1.xpose.msra.mxu0 0.0
        %1799 = vmatprep.mubr.f32.mxu0 0.0
        %1800 = vmatmul.mubr.f32.gmra.mrb[0].mxu0 %v1731
        %v1801 = vpop.f32.mrb[0].mxu0
        %v1802 = vadd.f32 0.0, %v1801
        %v1803 = vpop.f32.mrb[0].mxu0
        %1804 = vdwg.mxu0
        %1805 = vrot.lane.b32.xlu0 %v735, 104
        %v1806 = vpop.permute.xlu0 %1805
        %1807 = vrot.lane.b32.xlu0 %v735, 72
        %v1808 = vpop.permute.xlu0 %1807
        %v1809 = vsel %vm741, %v1806, 0
        %v1811 = vsel %vm741, %v1808, 0
        %1813 = vmatprep.subr.mxu0 0.0
        %1814 = vmatpush1.xpose.msra.mxu0 %v1811
        %1815 = vmatprep.subr.mxu0 0.0
        %1816 = vmatpush1.xpose.msra.mxu0 0.0
        %1817 = vmatprep.subr.mxu0 0.0
        %1818 = vmatpush1.xpose.msra.mxu0 0.0
        %1819 = vmatprep.subr.mxu0 0.0
        %1820 = vmatpush1.xpose.msra.mxu0 0.0
        %1821 = vmatprep.subr.mxu0 0.0
        %1822 = vmatpush1.xpose.msra.mxu0 0.0
        %1823 = vmatprep.subr.mxu0 0.0
        %1824 = vmatpush1.xpose.msra.mxu0 0.0
        %1825 = vmatprep.subr.mxu0 0.0
        %1826 = vmatpush1.xpose.msra.mxu0 0.0
        %1827 = vmatprep.subr.mxu0 0.0
        %1828 = vmatpush1.xpose.msra.mxu0 0.0
        %1829 = vmatprep.subr.mxu0 0.0
        %1830 = vmatpush1.xpose.msra.mxu0 0.0
        %1831 = vmatprep.subr.mxu0 0.0
        %1832 = vmatpush1.xpose.msra.mxu0 0.0
        %1833 = vmatprep.subr.mxu0 0.0
        %1834 = vmatpush1.xpose.msra.mxu0 0.0
        %1835 = vmatprep.subr.mxu0 0.0
        %1836 = vmatpush1.xpose.msra.mxu0 0.0
        %1837 = vmatprep.subr.mxu0 0.0
        %1838 = vmatpush1.xpose.msra.mxu0 0.0
        %1839 = vmatprep.subr.mxu0 0.0
        %1840 = vmatpush1.xpose.msra.mxu0 0.0
        %1841 = vmatprep.subr.mxu0 0.0
        %1842 = vmatpush1.xpose.msra.mxu0 0.0
        %1843 = vmatprep.subr.mxu0 0.0
        %1844 = vmatpush1.xpose.msra.mxu0 0.0
        %1845 = vmatprep.subr.mxu0 0.0
        %1846 = vmatpush1.xpose.msra.mxu0 0.0
        %1847 = vmatprep.subr.mxu0 0.0
        %1848 = vmatpush1.xpose.msra.mxu0 0.0
        %1849 = vmatprep.subr.mxu0 0.0
        %1850 = vmatpush1.xpose.msra.mxu0 0.0
        %1851 = vmatprep.subr.mxu0 0.0
        %1852 = vmatpush1.xpose.msra.mxu0 0.0
        %1853 = vmatprep.subr.mxu0 0.0
        %1854 = vmatpush1.xpose.msra.mxu0 0.0
        %1855 = vmatprep.subr.mxu0 0.0
        %1856 = vmatpush1.xpose.msra.mxu0 0.0
        %1857 = vmatprep.subr.mxu0 0.0
        %1858 = vmatpush1.xpose.msra.mxu0 0.0
        %1859 = vmatprep.subr.mxu0 0.0
        %1860 = vmatpush1.xpose.msra.mxu0 0.0
        %1861 = vmatprep.subr.mxu0 0.0
        %1862 = vmatpush1.xpose.msra.mxu0 0.0
        %1863 = vmatprep.subr.mxu0 0.0
        %1864 = vmatpush1.xpose.msra.mxu0 0.0
        %1865 = vmatprep.subr.mxu0 0.0
        %1866 = vmatpush1.xpose.msra.mxu0 0.0
        %1867 = vmatprep.subr.mxu0 0.0
        %1868 = vmatpush1.xpose.msra.mxu0 0.0
        %1869 = vmatprep.subr.mxu0 0.0
        %1870 = vmatpush1.xpose.msra.mxu0 0.0
        %1871 = vmatprep.subr.mxu0 0.0
        %1872 = vmatpush1.xpose.msra.mxu0 0.0
        %1873 = vmatprep.subr.mxu0 0.0
        %1874 = vmatpush1.xpose.msra.mxu0 0.0
        %1875 = vmatprep.subr.mxu0 0.0
        %1876 = vmatpush1.xpose.msra.mxu0 0.0
        %1877 = vmatprep.mubr.f32.mxu0 0.0
        %1878 = vmatmul.mubr.f32.gmra.mrb[0].mxu0 %v1809
        %v1879 = vpop.f32.mrb[0].mxu0
        %v1880 = vadd.f32 0.0, %v1879
        %v1881 = vpop.f32.mrb[0].mxu0
        %1882 = vdwg.mxu0
        %v1883 = vsel %vm741, %v1802, -inf
        %1884 = vmax.xlane.f32.xlu0 %v1883
        %v1885 = vpop.xlane.xlu0 %1884
        %v1886 = vsel %vm741, %v1880, -inf
        %1887 = vmax.xlane.f32.xlu0 %v1886
        %v1888 = vpop.xlane.xlu0 %1887
        %v1889 = vsub.f32 %v1802, %v1885
        %v1890 = vsub.f32 %v1880, %v1888
        %v1891 = vmul.f32 %v1889, 1.442695
        %v1892 = vpow.pop %v1891
        %v1893 = vmul.f32 %v1890, 1.442695
        %v1894 = vpow.pop %v1893
        %v1895 = vsel %vm741, %v1892, 0.0
        %1896 = vadd.xlane.f32.xlu0 %v1895
        %v1897 = vpop.xlane.xlu0 %1896
        %v1898 = vsel %vm741, %v1894, 0.0
        %1899 = vadd.xlane.f32.xlu0 %v1898
        %v1900 = vpop.xlane.xlu0 %1899
        %v1901 = vrcp.pop %v1897
        %v1902 = vmul.f32 %v1892, %v1901
        %v1903 = vrcp.pop %v1900
        %v1904 = vmul.f32 %v1894, %v1903
        %1905 = vrot.lane.b32.xlu0 %v730, 40
        %v1906 = vpop.permute.xlu0 %1905
        %v1909 = vsel %vm741, %v1902, 0
        %1911 = vmatprep.subr.mxu0 0.0
        %1912 = vmatpush1.msra.mxu0 %v1906
        %1913 = vmatprep.subr.mxu0 0.0
        %1914 = vmatpush1.msra.mxu0 0.0
        %1915 = vmatprep.subr.mxu0 0.0
        %1916 = vmatpush1.msra.mxu0 0.0
        %1917 = vmatprep.subr.mxu0 0.0
        %1918 = vmatpush1.msra.mxu0 0.0
        %1919 = vmatprep.subr.mxu0 0.0
        %1920 = vmatpush1.msra.mxu0 0.0
        %1921 = vmatprep.subr.mxu0 0.0
        %1922 = vmatpush1.msra.mxu0 0.0
        %1923 = vmatprep.subr.mxu0 0.0
        %1924 = vmatpush1.msra.mxu0 0.0
        %1925 = vmatprep.subr.mxu0 0.0
        %1926 = vmatpush1.msra.mxu0 0.0
        %1927 = vmatprep.subr.mxu0 0.0
        %1928 = vmatpush1.msra.mxu0 0.0
        %1929 = vmatprep.subr.mxu0 0.0
        %1930 = vmatpush1.msra.mxu0 0.0
        %1931 = vmatprep.subr.mxu0 0.0
        %1932 = vmatpush1.msra.mxu0 0.0
        %1933 = vmatprep.subr.mxu0 0.0
        %1934 = vmatpush1.msra.mxu0 0.0
        %1935 = vmatprep.subr.mxu0 0.0
        %1936 = vmatpush1.msra.mxu0 0.0
        %1937 = vmatprep.subr.mxu0 0.0
        %1938 = vmatpush1.msra.mxu0 0.0
        %1939 = vmatprep.subr.mxu0 0.0
        %1940 = vmatpush1.msra.mxu0 0.0
        %1941 = vmatprep.subr.mxu0 0.0
        %1942 = vmatpush1.msra.mxu0 0.0
        %1943 = vmatprep.subr.mxu0 0.0
        %1944 = vmatpush1.msra.mxu0 0.0
        %1945 = vmatprep.subr.mxu0 0.0
        %1946 = vmatpush1.msra.mxu0 0.0
        %1947 = vmatprep.subr.mxu0 0.0
        %1948 = vmatpush1.msra.mxu0 0.0
        %1949 = vmatprep.subr.mxu0 0.0
        %1950 = vmatpush1.msra.mxu0 0.0
        %1951 = vmatprep.subr.mxu0 0.0
        %1952 = vmatpush1.msra.mxu0 0.0
        %1953 = vmatprep.subr.mxu0 0.0
        %1954 = vmatpush1.msra.mxu0 0.0
        %1955 = vmatprep.subr.mxu0 0.0
        %1956 = vmatpush1.msra.mxu0 0.0
        %1957 = vmatprep.subr.mxu0 0.0
        %1958 = vmatpush1.msra.mxu0 0.0
        %1959 = vmatprep.subr.mxu0 0.0
        %1960 = vmatpush1.msra.mxu0 0.0
        %1961 = vmatprep.subr.mxu0 0.0
        %1962 = vmatpush1.msra.mxu0 0.0
        %1963 = vmatprep.subr.mxu0 0.0
        %1964 = vmatpush1.msra.mxu0 0.0
        %1965 = vmatprep.subr.mxu0 0.0
        %1966 = vmatpush1.msra.mxu0 0.0
        %1967 = vmatprep.subr.mxu0 0.0
        %1968 = vmatpush1.msra.mxu0 0.0
        %1969 = vmatprep.subr.mxu0 0.0
        %1970 = vmatpush1.msra.mxu0 0.0
        %1971 = vmatprep.subr.mxu0 0.0
        %1972 = vmatpush1.msra.mxu0 0.0
        %1973 = vmatprep.subr.mxu0 0.0
        %1974 = vmatpush1.msra.mxu0 0.0
        %1975 = vmatprep.mubr.f32.mxu0 0.0
        %1976 = vmatmul.mubr.f32.gmra.mrb[0].mxu0 %v1909
        %v1977 = vpop.f32.mrb[0].mxu0
        %v1978 = vadd.f32 0.0, %v1977
        %v1979 = vpop.f32.mrb[0].mxu0
        %1980 = vdwg.mxu0
        %1981 = vrot.lane.b32.xlu0 %v735, 40
        %v1982 = vpop.permute.xlu0 %1981
        %v1985 = vsel %vm741, %v1904, 0
        %1987 = vmatprep.subr.mxu0 0.0
        %1988 = vmatpush1.msra.mxu0 %v1982
        %1989 = vmatprep.subr.mxu0 0.0
        %1990 = vmatpush1.msra.mxu0 0.0
        %1991 = vmatprep.subr.mxu0 0.0
        %1992 = vmatpush1.msra.mxu0 0.0
        %1993 = vmatprep.subr.mxu0 0.0
        %1994 = vmatpush1.msra.mxu0 0.0
        %1995 = vmatprep.subr.mxu0 0.0
        %1996 = vmatpush1.msra.mxu0 0.0
        %1997 = vmatprep.subr.mxu0 0.0
        %1998 = vmatpush1.msra.mxu0 0.0
        %1999 = vmatprep.subr.mxu0 0.0
        %2000 = vmatpush1.msra.mxu0 0.0
        %2001 = vmatprep.subr.mxu0 0.0
        %2002 = vmatpush1.msra.mxu0 0.0
        %2003 = vmatprep.subr.mxu0 0.0
        %2004 = vmatpush1.msra.mxu0 0.0
        %2005 = vmatprep.subr.mxu0 0.0
        %2006 = vmatpush1.msra.mxu0 0.0
        %2007 = vmatprep.subr.mxu0 0.0
        %2008 = vmatpush1.msra.mxu0 0.0
        %2009 = vmatprep.subr.mxu0 0.0
        %2010 = vmatpush1.msra.mxu0 0.0
        %2011 = vmatprep.subr.mxu0 0.0
        %2012 = vmatpush1.msra.mxu0 0.0
        %2013 = vmatprep.subr.mxu0 0.0
        %2014 = vmatpush1.msra.mxu0 0.0
        %2015 = vmatprep.subr.mxu0 0.0
        %2016 = vmatpush1.msra.mxu0 0.0
        %2017 = vmatprep.subr.mxu0 0.0
        %2018 = vmatpush1.msra.mxu0 0.0
        %2019 = vmatprep.subr.mxu0 0.0
        %2020 = vmatpush1.msra.mxu0 0.0
        %2021 = vmatprep.subr.mxu0 0.0
        %2022 = vmatpush1.msra.mxu0 0.0
        %2023 = vmatprep.subr.mxu0 0.0
        %2024 = vmatpush1.msra.mxu0 0.0
        %2025 = vmatprep.subr.mxu0 0.0
        %2026 = vmatpush1.msra.mxu0 0.0
        %2027 = vmatprep.subr.mxu0 0.0
        %2028 = vmatpush1.msra.mxu0 0.0
        %2029 = vmatprep.subr.mxu0 0.0
        %2030 = vmatpush1.msra.mxu0 0.0
        %2031 = vmatprep.subr.mxu0 0.0
        %2032 = vmatpush1.msra.mxu0 0.0
        %2033 = vmatprep.subr.mxu0 0.0
        %2034 = vmatpush1.msra.mxu0 0.0
        %2035 = vmatprep.subr.mxu0 0.0
        %2036 = vmatpush1.msra.mxu0 0.0
        %2037 = vmatprep.subr.mxu0 0.0
        %2038 = vmatpush1.msra.mxu0 0.0
        %2039 = vmatprep.subr.mxu0 0.0
        %2040 = vmatpush1.msra.mxu0 0.0
        %2041 = vmatprep.subr.mxu0 0.0
        %2042 = vmatpush1.msra.mxu0 0.0
        %2043 = vmatprep.subr.mxu0 0.0
        %2044 = vmatpush1.msra.mxu0 0.0
        %2045 = vmatprep.subr.mxu0 0.0
        %2046 = vmatpush1.msra.mxu0 0.0
        %2047 = vmatprep.subr.mxu0 0.0
        %2048 = vmatpush1.msra.mxu0 0.0
        %2049 = vmatprep.subr.mxu0 0.0
        %2050 = vmatpush1.msra.mxu0 0.0
        %2051 = vmatprep.mubr.f32.mxu0 0.0
        %2052 = vmatmul.mubr.f32.gmra.mrb[0].mxu0 %v1985
        %v2053 = vpop.f32.mrb[0].mxu0
        %v2054 = vadd.f32 0.0, %v2053
        %v2055 = vpop.f32.mrb[0].mxu0
        %2056 = vdwg.mxu0
        %2059 = vrot.lane.b32.xlu0 %v1318, 8
        %v2060 = vpop.permute.xlu0 %2059
        %2061 = vrot.lane.b32.xlu0 %v1394, 8
        %v2062 = vpop.permute.xlu0 %2061
        %2067 = vrot.lane.b32.xlu0 %v1648, 16
        %v2068 = vpop.permute.xlu0 %2067
        %2069 = vrot.lane.b32.xlu0 %v1724, 16
        %v2070 = vpop.permute.xlu0 %2069
        %2075 = vrot.lane.b32.xlu0 %v1978, 24
        %v2076 = vpop.permute.xlu0 %2075
        %2077 = vrot.lane.b32.xlu0 %v2054, 24
        %v2078 = vpop.permute.xlu0 %2077
        %v2081 = vsel %vm741, %v988, %v2060
        %v2082 = vsel %vm741, %v1064, %v2062
        %vm2083 = vcmask 130048
        %v2084 = vsel %vm2083, %v2081, %v2068
        %v2085 = vsel %vm2083, %v2082, %v2070
        %vm2086 = vcmask 195584
        %v2087 = vsel %vm2086, %v2084, %v2076
        %v2088 = vsel %vm2086, %v2085, %v2078
        %v2089 = vld [vmem:[%s605] sm:$0xff]
        %v2090 = vld [vmem:[%s605 + $0x8] sm:$0xff]
        %v2091 = vld [vmem:[%s605 + $0x10] sm:$0xff]
        %v2092 = vld [vmem:[%s605 + $0x18] sm:$0xff]
        %v2093 = vld [vmem:[%s608] sm:$0x1]
        %v2095 = vlaneseq
        %v2096 = vshrl.u32 %v2095, 7
        %v2097 = vsub.s32 0, %v2096
        %v2098 = vrot.slane %v2093, %v2097
        %v2101 = vsel %vm656, %v2087, 0
        %v2104 = vsel %vm656, %v2088, 0
        %2106 = vmatprep.subr.mxu0 0.0
        %2107 = vmatpush1.msra.mxu0 %v2089
        %2108 = vmatprep.subr.mxu0 0.0
        %2109 = vmatpush1.msra.mxu0 %v2090
        %2110 = vmatprep.subr.mxu0 0.0
        %2111 = vmatpush1.msra.mxu0 %v2091
        %2112 = vmatprep.subr.mxu0 0.0
        %2113 = vmatpush1.msra.mxu0 %v2092
        %2114 = vmatprep.subr.mxu0 0.0
        %2115 = vmatpush1.msra.mxu0 0.0
        %2116 = vmatprep.subr.mxu0 0.0
        %2117 = vmatpush1.msra.mxu0 0.0
        %2118 = vmatprep.subr.mxu0 0.0
        %2119 = vmatpush1.msra.mxu0 0.0
        %2120 = vmatprep.subr.mxu0 0.0
        %2121 = vmatpush1.msra.mxu0 0.0
        %2122 = vmatprep.subr.mxu0 0.0
        %2123 = vmatpush1.msra.mxu0 0.0
        %2124 = vmatprep.subr.mxu0 0.0
        %2125 = vmatpush1.msra.mxu0 0.0
        %2126 = vmatprep.subr.mxu0 0.0
        %2127 = vmatpush1.msra.mxu0 0.0
        %2128 = vmatprep.subr.mxu0 0.0
        %2129 = vmatpush1.msra.mxu0 0.0
        %2130 = vmatprep.subr.mxu0 0.0
        %2131 = vmatpush1.msra.mxu0 0.0
        %2132 = vmatprep.subr.mxu0 0.0
        %2133 = vmatpush1.msra.mxu0 0.0
        %2134 = vmatprep.subr.mxu0 0.0
        %2135 = vmatpush1.msra.mxu0 0.0
        %2136 = vmatprep.subr.mxu0 0.0
        %2137 = vmatpush1.msra.mxu0 0.0
        %2138 = vmatprep.subr.mxu0 0.0
        %2139 = vmatpush1.msra.mxu0 0.0
        %2140 = vmatprep.subr.mxu0 0.0
        %2141 = vmatpush1.msra.mxu0 0.0
        %2142 = vmatprep.subr.mxu0 0.0
        %2143 = vmatpush1.msra.mxu0 0.0
        %2144 = vmatprep.subr.mxu0 0.0
        %2145 = vmatpush1.msra.mxu0 0.0
        %2146 = vmatprep.subr.mxu0 0.0
        %2147 = vmatpush1.msra.mxu0 0.0
        %2148 = vmatprep.subr.mxu0 0.0
        %2149 = vmatpush1.msra.mxu0 0.0
        %2150 = vmatprep.subr.mxu0 0.0
        %2151 = vmatpush1.msra.mxu0 0.0
        %2152 = vmatprep.subr.mxu0 0.0
        %2153 = vmatpush1.msra.mxu0 0.0
        %2154 = vmatprep.subr.mxu0 0.0
        %2155 = vmatpush1.msra.mxu0 0.0
        %2156 = vmatprep.subr.mxu0 0.0
        %2157 = vmatpush1.msra.mxu0 0.0
        %2158 = vmatprep.subr.mxu0 0.0
        %2159 = vmatpush1.msra.mxu0 0.0
        %2160 = vmatprep.subr.mxu0 0.0
        %2161 = vmatpush1.msra.mxu0 0.0
        %2162 = vmatprep.subr.mxu0 0.0
        %2163 = vmatpush1.msra.mxu0 0.0
        %2164 = vmatprep.subr.mxu0 0.0
        %2165 = vmatpush1.msra.mxu0 0.0
        %2166 = vmatprep.subr.mxu0 0.0
        %2167 = vmatpush1.msra.mxu0 0.0
        %2168 = vmatprep.subr.mxu0 0.0
        %2169 = vmatpush1.msra.mxu0 0.0
        %2170 = vmatprep.mubr.f32.mxu0 0.0
        %2171 = vmatmul.mubr.f32.gmra.mrb[0].mxu0 %v2101
        %v2172 = vpop.f32.mrb[0].mxu0
        %v2173 = vadd.f32 %v2098, %v2172
        %v2174 = vpop.f32.mrb[0].mxu0
        %2175 = vmatprep.mubr.f32.mxu0 0.0
        %2176 = vmatmul.mubr.f32.gmra.mrb[0].mxu0 %v2104
        %v2177 = vpop.f32.mrb[0].mxu0
        %v2178 = vadd.f32 %v2098, %v2177
        %v2179 = vpop.f32.mrb[0].mxu0
        %2180 = vdwg.mxu0
        %v2181 = vadd.f32 %v643, %v2173
        %v2182 = vadd.f32 %v644, %v2178
        %v2183 = vld [vmem:[%s627] sm:$0x1]
        %v2184 = vld [vmem:[%s630] sm:$0x1]
        %v2185 = vsel %vm656, %v2181, 0.0
        %2186 = vadd.xlane.f32.xlu0 %v2185
        %v2187 = vpop.xlane.xlu0 %2186
        %v2188 = vsel %vm656, %v2182, 0.0
        %2189 = vadd.xlane.f32.xlu0 %v2188
        %v2190 = vpop.xlane.xlu0 %2189
        %v2191 = vrcp.pop 32.0
        %v2192 = vmul.f32 %v2187, %v2191
        %v2193 = vmul.f32 %v2190, %v2191
        %v2194 = vsub.f32 %v2181, %v2192
        %v2195 = vsub.f32 %v2182, %v2193
        %v2196 = vmul.f32 %v2194, %v2194
        %v2197 = vmul.f32 %v2195, %v2195
        %v2198 = vsel %vm656, %v2196, 0.0
        %2199 = vadd.xlane.f32.xlu0 %v2198
        %v2200 = vpop.xlane.xlu0 %2199
        %v2201 = vsel %vm656, %v2197, 0.0
        %2202 = vadd.xlane.f32.xlu0 %v2201
        %v2203 = vpop.xlane.xlu0 %2202
        %v2204 = vmul.f32 %v2200, %v2191
        %v2205 = vmul.f32 %v2203, %v2191
        %v2206 = vadd.f32 %v2204, 1e-05
        %v2207 = vadd.f32 %v2205, 1e-05
        %v2208 = vrsqrt.pop %v2206
        %v2209 = vrsqrt.pop %v2207
        %v2210 = vmul.f32 %v2194, %v2208
        %v2211 = vmul.f32 %v2195, %v2209
        %v2213 = vlaneseq
        %v2214 = vshrl.u32 %v2213, 7
        %v2215 = vsub.s32 0, %v2214
        %v2216 = vrot.slane %v2183, %v2215
        %v2218 = vmul.f32 %v2210, %v2216
        %v2219 = vmul.f32 %v2211, %v2216
        %v2221 = vlaneseq
        %v2222 = vshrl.u32 %v2221, 7
        %v2223 = vsub.s32 0, %v2222
        %v2224 = vrot.slane %v2184, %v2223
        %v2226 = vadd.f32 %v2218, %v2224
        %v2227 = vadd.f32 %v2219, %v2224
        %v2228 = vld [vmem:[%s613] sm:$0xff]
        %v2229 = vld [vmem:[%s613 + $0x8] sm:$0xff]
        %v2230 = vld [vmem:[%s613 + $0x10] sm:$0xff]
        %v2231 = vld [vmem:[%s613 + $0x18] sm:$0xff]
        %v2232 = vld [vmem:[%s616] sm:$0x1]
        %v2234 = vlaneseq
        %v2235 = vshrl.u32 %v2234, 7
        %v2236 = vsub.s32 0, %v2235
        %v2237 = vrot.slane %v2232, %v2236
        %v2240 = vsel %vm656, %v2226, 0
        %v2243 = vsel %vm656, %v2227, 0
        %2245 = vmatprep.subr.mxu0 0.0
        %2246 = vmatpush1.msra.mxu0 %v2228
        %2247 = vmatprep.subr.mxu0 0.0
        %2248 = vmatpush1.msra.mxu0 %v2229
        %2249 = vmatprep.subr.mxu0 0.0
        %2250 = vmatpush1.msra.mxu0 %v2230
        %2251 = vmatprep.subr.mxu0 0.0
        %2252 = vmatpush1.msra.mxu0 %v2231
        %2253 = vmatprep.subr.mxu0 0.0
        %2254 = vmatpush1.msra.mxu0 0.0
        %2255 = vmatprep.subr.mxu0 0.0
        %2256 = vmatpush1.msra.mxu0 0.0
        %2257 = vmatprep.subr.mxu0 0.0
        %2258 = vmatpush1.msra.mxu0 0.0
        %2259 = vmatprep.subr.mxu0 0.0
        %2260 = vmatpush1.msra.mxu0 0.0
        %2261 = vmatprep.subr.mxu0 0.0
        %2262 = vmatpush1.msra.mxu0 0.0
        %2263 = vmatprep.subr.mxu0 0.0
        %2264 = vmatpush1.msra.mxu0 0.0
        %2265 = vmatprep.subr.mxu0 0.0
        %2266 = vmatpush1.msra.mxu0 0.0
        %2267 = vmatprep.subr.mxu0 0.0
        %2268 = vmatpush1.msra.mxu0 0.0
        %2269 = vmatprep.subr.mxu0 0.0
        %2270 = vmatpush1.msra.mxu0 0.0
        %2271 = vmatprep.subr.mxu0 0.0
        %2272 = vmatpush1.msra.mxu0 0.0
        %2273 = vmatprep.subr.mxu0 0.0
        %2274 = vmatpush1.msra.mxu0 0.0
        %2275 = vmatprep.subr.mxu0 0.0
        %2276 = vmatpush1.msra.mxu0 0.0
        %2277 = vmatprep.subr.mxu0 0.0
        %2278 = vmatpush1.msra.mxu0 0.0
        %2279 = vmatprep.subr.mxu0 0.0
        %2280 = vmatpush1.msra.mxu0 0.0
        %2281 = vmatprep.subr.mxu0 0.0
        %2282 = vmatpush1.msra.mxu0 0.0
        %2283 = vmatprep.subr.mxu0 0.0
        %2284 = vmatpush1.msra.mxu0 0.0
        %2285 = vmatprep.subr.mxu0 0.0
        %2286 = vmatpush1.msra.mxu0 0.0
        %2287 = vmatprep.subr.mxu0 0.0
        %2288 = vmatpush1.msra.mxu0 0.0
        %2289 = vmatprep.subr.mxu0 0.0
        %2290 = vmatpush1.msra.mxu0 0.0
        %2291 = vmatprep.subr.mxu0 0.0
        %2292 = vmatpush1.msra.mxu0 0.0
        %2293 = vmatprep.subr.mxu0 0.0
        %2294 = vmatpush1.msra.mxu0 0.0
        %2295 = vmatprep.subr.mxu0 0.0
        %2296 = vmatpush1.msra.mxu0 0.0
        %2297 = vmatprep.subr.mxu0 0.0
        %2298 = vmatpush1.msra.mxu0 0.0
        %2299 = vmatprep.subr.mxu0 0.0
        %2300 = vmatpush1.msra.mxu0 0.0
        %2301 = vmatprep.subr.mxu0 0.0
        %2302 = vmatpush1.msra.mxu0 0.0
        %2303 = vmatprep.subr.mxu0 0.0
        %2304 = vmatpush1.msra.mxu0 0.0
        %2305 = vmatprep.subr.mxu0 0.0
        %2306 = vmatpush1.msra.mxu0 0.0
        %2307 = vmatprep.subr.mxu0 0.0
        %2308 = vmatpush1.msra.mxu0 0.0
        %2309 = vmatprep.mubr.f32.mxu0 0.0
        %2310 = vmatmul.mubr.f32.gmra.mrb[0].mxu0 %v2240
        %v2311 = vpop.f32.mrb[0].mxu0
        %v2312 = vadd.f32 %v2237, %v2311
        %v2313 = vpop.f32.mrb[0].mxu0
        %2314 = vmatprep.mubr.f32.mxu0 0.0
        %2315 = vmatmul.mubr.f32.gmra.mrb[0].mxu0 %v2243
        %v2316 = vpop.f32.mrb[0].mxu0
        %v2317 = vadd.f32 %v2237, %v2316
        %v2318 = vpop.f32.mrb[0].mxu0
        %2319 = vdwg.mxu0
        %v2320 = vmul.f32 %v2312, 0.5
        %v2321 = vmul.f32 %v2317, 0.5
        %v2322 = vmul.f32 %v2312, 0.70710677
        %v2323 = vmul.f32 %v2317, 0.70710677
        %vm2324 = vcmp.ge.f32.partialorder %v2322, 0.0
        %vm2325 = vcmp.ge.f32.partialorder %v2323, 0.0
        %v2326 = vsel %vm2324, 1.0, -1.0
        %v2327 = vsel %vm2325, 1.0, -1.0
        %v2328 = vand.u32 2147483647, %v2322
        %v2329 = vand.u32 2147483647, %v2323
        %v2330 = vmul.f32 %v2328, 0.3275911
        %v2331 = vmul.f32 %v2329, 0.3275911
        %v2332 = vadd.f32 %v2330, 1.0
        %v2333 = vadd.f32 %v2331, 1.0
        %v2334 = vrcp.pop %v2332
        %v2335 = vmul.f32 1.0, %v2334
        %v2336 = vrcp.pop %v2333
        %v2337 = vmul.f32 1.0, %v2336
        %v2338 = vmul.f32 %v2335, 1.0614054
        %v2339 = vmul.f32 %v2337, 1.0614054
        %v2340 = vadd.f32 %v2338, -1.4531521
        %v2341 = vadd.f32 %v2339, -1.4531521
        %v2342 = vmul.f32 %v2340, %v2335
        %v2343 = vmul.f32 %v2341, %v2337
        %v2344 = vadd.f32 %v2342, 1.4214138
        %v2345 = vadd.f32 %v2343, 1.4214138
        %v2346 = vmul.f32 %v2344, %v2335
        %v2347 = vmul.f32 %v2345, %v2337
        %v2348 = vadd.f32 %v2346, -0.28449672
        %v2349 = vadd.f32 %v2347, -0.28449672
        %v2350 = vmul.f32 %v2348, %v2335
        %v2351 = vmul.f32 %v2349, %v2337
        %v2352 = vadd.f32 %v2350, 0.2548296
        %v2353 = vadd.f32 %v2351, 0.2548296
        %v2354 = vmul.f32 %v2352, %v2335
        %v2355 = vmul.f32 %v2353, %v2337
        %v2356 = vsub.f32 0.0, %v2328
        %v2357 = vsub.f32 0.0, %v2329
        %v2358 = vmul.f32 %v2356, %v2328
        %v2359 = vmul.f32 %v2357, %v2329
        %v2360 = vmul.f32 %v2358, 1.442695
        %v2361 = vpow.pop %v2360
        %v2362 = vmul.f32 %v2359, 1.442695
        %v2363 = vpow.pop %v2362
        %v2364 = vmul.f32 %v2354, %v2361
        %v2365 = vmul.f32 %v2355, %v2363
        %v2366 = vsub.f32 1.0, %v2364
        %v2367 = vsub.f32 1.0, %v2365
        %v2368 = vmul.f32 %v2326, %v2366
        %v2369 = vmul.f32 %v2327, %v2367
        %v2370 = vadd.f32 %v2368, 1.0
        %v2371 = vadd.f32 %v2369, 1.0
        %v2372 = vmul.f32 %v2320, %v2370
        %v2373 = vmul.f32 %v2321, %v2371
        %v2374 = vld [vmem:[%s621] sm:$0xff]
        %v2375 = vld [vmem:[%s621 + $0x8] sm:$0xff]
        %v2376 = vld [vmem:[%s621 + $0x10] sm:$0xff]
        %v2377 = vld [vmem:[%s621 + $0x18] sm:$0xff]
        %v2378 = vld [vmem:[%s621 + $0x20] sm:$0xff]
        %v2379 = vld [vmem:[%s621 + $0x28] sm:$0xff]
        %v2380 = vld [vmem:[%s621 + $0x30] sm:$0xff]
        %v2381 = vld [vmem:[%s621 + $0x38] sm:$0xff]
        %v2382 = vld [vmem:[%s624] sm:$0x1]
        %v2384 = vlaneseq
        %v2385 = vshrl.u32 %v2384, 7
        %v2386 = vsub.s32 0, %v2385
        %v2387 = vrot.slane %v2382, %v2386
        %vm2389 = vcmask 523264
        %v2391 = vsel %vm2389, %v2372, 0
        %v2394 = vsel %vm2389, %v2373, 0
        %2396 = vmatprep.subr.mxu0 0.0
        %2397 = vmatpush1.msra.mxu0 %v2374
        %2398 = vmatprep.subr.mxu0 0.0
        %2399 = vmatpush1.msra.mxu0 %v2375
        %2400 = vmatprep.subr.mxu0 0.0
        %2401 = vmatpush1.msra.mxu0 %v2376
        %2402 = vmatprep.subr.mxu0 0.0
        %2403 = vmatpush1.msra.mxu0 %v2377
        %2404 = vmatprep.subr.mxu0 0.0
        %2405 = vmatpush1.msra.mxu0 %v2378
        %2406 = vmatprep.subr.mxu0 0.0
        %2407 = vmatpush1.msra.mxu0 %v2379
        %2408 = vmatprep.subr.mxu0 0.0
        %2409 = vmatpush1.msra.mxu0 %v2380
        %2410 = vmatprep.subr.mxu0 0.0
        %2411 = vmatpush1.msra.mxu0 %v2381
        %2412 = vmatprep.subr.mxu0 0.0
        %2413 = vmatpush1.msra.mxu0 0.0
        %2414 = vmatprep.subr.mxu0 0.0
        %2415 = vmatpush1.msra.mxu0 0.0
        %2416 = vmatprep.subr.mxu0 0.0
        %2417 = vmatpush1.msra.mxu0 0.0
        %2418 = vmatprep.subr.mxu0 0.0
        %2419 = vmatpush1.msra.mxu0 0.0
        %2420 = vmatprep.subr.mxu0 0.0
        %2421 = vmatpush1.msra.mxu0 0.0
        %2422 = vmatprep.subr.mxu0 0.0
        %2423 = vmatpush1.msra.mxu0 0.0
        %2424 = vmatprep.subr.mxu0 0.0
        %2425 = vmatpush1.msra.mxu0 0.0
        %2426 = vmatprep.subr.mxu0 0.0
        %2427 = vmatpush1.msra.mxu0 0.0
        %2428 = vmatprep.subr.mxu0 0.0
        %2429 = vmatpush1.msra.mxu0 0.0
        %2430 = vmatprep.subr.mxu0 0.0
        %2431 = vmatpush1.msra.mxu0 0.0
        %2432 = vmatprep.subr.mxu0 0.0
        %2433 = vmatpush1.msra.mxu0 0.0
        %2434 = vmatprep.subr.mxu0 0.0
        %2435 = vmatpush1.msra.mxu0 0.0
        %2436 = vmatprep.subr.mxu0 0.0
        %2437 = vmatpush1.msra.mxu0 0.0
        %2438 = vmatprep.subr.mxu0 0.0
        %2439 = vmatpush1.msra.mxu0 0.0
        %2440 = vmatprep.subr.mxu0 0.0
        %2441 = vmatpush1.msra.mxu0 0.0
        %2442 = vmatprep.subr.mxu0 0.0
        %2443 = vmatpush1.msra.mxu0 0.0
        %2444 = vmatprep.subr.mxu0 0.0
        %2445 = vmatpush1.msra.mxu0 0.0
        %2446 = vmatprep.subr.mxu0 0.0
        %2447 = vmatpush1.msra.mxu0 0.0
        %2448 = vmatprep.subr.mxu0 0.0
        %2449 = vmatpush1.msra.mxu0 0.0
        %2450 = vmatprep.subr.mxu0 0.0
        %2451 = vmatpush1.msra.mxu0 0.0
        %2452 = vmatprep.subr.mxu0 0.0
        %2453 = vmatpush1.msra.mxu0 0.0
        %2454 = vmatprep.subr.mxu0 0.0
        %2455 = vmatpush1.msra.mxu0 0.0
        %2456 = vmatprep.subr.mxu0 0.0
        %2457 = vmatpush1.msra.mxu0 0.0
        %2458 = vmatprep.subr.mxu0 0.0
        %2459 = vmatpush1.msra.mxu0 0.0
        %2460 = vmatprep.mubr.f32.mxu0 0.0
        %2461 = vmatmul.mubr.f32.gmra.mrb[0].mxu0 %v2391
        %v2462 = vpop.f32.mrb[0].mxu0
        %v2463 = vadd.f32 %v2387, %v2462
        %v2464 = vpop.f32.mrb[0].mxu0
        %2465 = vmatprep.mubr.f32.mxu0 0.0
        %2466 = vmatmul.mubr.f32.gmra.mrb[0].mxu0 %v2394
        %v2467 = vpop.f32.mrb[0].mxu0
        %v2468 = vadd.f32 %v2387, %v2467
        %v2469 = vpop.f32.mrb[0].mxu0
        %2470 = vdwg.mxu0
        %v2471 = vadd.f32 %v2226, %v2463
        %v2472 = vadd.f32 %v2227, %v2468
        %v2473 = vld [vmem:[%s633] sm:$0x1]
        %v2474 = vld [vmem:[%s515] sm:$0x1]
        %v2475 = vsel %vm656, %v2471, 0.0
        %2476 = vadd.xlane.f32.xlu0 %v2475
        %v2477 = vpop.xlane.xlu0 %2476
        %v2478 = vsel %vm656, %v2472, 0.0
        %2479 = vadd.xlane.f32.xlu0 %v2478
        %v2480 = vpop.xlane.xlu0 %2479
        %v2481 = vmul.f32 %v2477, %v2191
        %v2482 = vmul.f32 %v2480, %v2191
        %v2483 = vsub.f32 %v2471, %v2481
        %v2484 = vsub.f32 %v2472, %v2482
        %v2485 = vmul.f32 %v2483, %v2483
        %v2486 = vmul.f32 %v2484, %v2484
        %v2487 = vsel %vm656, %v2485, 0.0
        %2488 = vadd.xlane.f32.xlu0 %v2487
        %v2489 = vpop.xlane.xlu0 %2488
        %v2490 = vsel %vm656, %v2486, 0.0
        %2491 = vadd.xlane.f32.xlu0 %v2490
        %v2492 = vpop.xlane.xlu0 %2491
        %v2493 = vmul.f32 %v2489, %v2191
        %v2494 = vmul.f32 %v2492, %v2191
        %v2495 = vadd.f32 %v2493, 1e-05
        %v2496 = vadd.f32 %v2494, 1e-05
        %v2497 = vrsqrt.pop %v2495
        %v2498 = vrsqrt.pop %v2496
        %v2499 = vmul.f32 %v2483, %v2497
        %v2500 = vmul.f32 %v2484, %v2498
        %v2502 = vlaneseq
        %v2503 = vshrl.u32 %v2502, 7
        %v2504 = vsub.s32 0, %v2503
        %v2505 = vrot.slane %v2473, %v2504
        %v2507 = vmul.f32 %v2499, %v2505
        %v2508 = vmul.f32 %v2500, %v2505
        %v2510 = vlaneseq
        %v2511 = vshrl.u32 %v2510, 7
        %v2512 = vsub.s32 0, %v2511
        %v2513 = vrot.slane %v2474, %v2512
        %v2515 = vadd.f32 %v2507, %v2513
        %v2516 = vadd.f32 %v2508, %v2513
        %2517 = vst.msk [vmem:[#allocation2] sm:$0xff] %vm656, %v2515
        %2518 = vst.msk [vmem:[#allocation2 + $0x8] sm:$0xff] %vm656, %v2516
        %2519 = vst.msk [vmem:[#allocation8] sm:$0xff] %vm656, %v2515
        %2520 = vst.msk [vmem:[#allocation8 + $0x8] sm:$0xff] %vm656, %v2516
        // Predicated region
        $region85: #{transformer_encoder_jit.1} parent=71 // pred_check
          %p2521 = pneg %p375
        $region86: #{transformer_encoder_jit.1} parent=71 // pred_check_branch
          %2523 = sbr.rel (%p2521) target = $region88
        $region87: #{transformer_encoder_jit.1} parent=71 // pred_region
          %s2525 = ssub.s32 256, 256
          %2526 = vsyncadd [#allocation5], %s2525
          %s2527 = sshll.u32 [#allocation8], 4
          %s2528 = int_to_ptr.vmem [resolvable:$true] %s2527
          %2533 = dma.vmem_to_hbm [thread:$0]  %s2528, 256, %s13, [#allocation5], 128, 128, 8
        $region88: #{transformer_encoder_jit.1} parent=71 // pred_fallthru
          _
        // Predicated region
        $region89: #{transformer_encoder_jit.1} parent=71 // pred_check
          %p2534 = pneg %p375
        $region90: #{transformer_encoder_jit.1} parent=71 // pred_check_branch
          %2536 = sbr.rel (%p2534) target = $region92
        $region91: #{transformer_encoder_jit.1} parent=71 // pred_region
          %2537 = dma.done [#allocation5], 256
        $region92: #{transformer_encoder_jit.1} parent=71 // pred_fallthru
          _
      $region72: #{transformer_encoder_jit.1} parent=5 // pred_fallthru
        _
      %p2538 = scmp.le.s32.totalorder 2, %s24
      // Predicated region
      $region93: #{transformer_encoder_jit.1} parent=5 // pred_check
        %p2539 = pneg %p2538
      $region94: #{transformer_encoder_jit.1} parent=5 // pred_check_branch
        %2541 = sbr.rel (%p2539) target = $region96
      $region95: #{transformer_encoder_jit.1} parent=5 // pred_region
        %s2542 = ssub.s32 %s24, 2
      $region96: #{transformer_encoder_jit.1} parent=5 // pred_fallthru
        _
    $region6: #{transformer_encoder_jit.1} parent=1 // loop_footer
      %s28 = sadd.s32 1, %s24
    $region7: #{transformer_encoder_jit.1} parent=1 // loop_footer_branch
      %23 = sbr.rel target = $region3
    $region8: #{transformer_encoder_jit.1} parent=1 // loop_exit
      _
    %2543 = vsyncpa [#allocation4], 1
    %s2544 = scalar_lea.sflag [#allocation4], 1
    %2545 = vsyncpa %s2544, 1
    %2546 = vsyncpa [#allocation7], 1
    %s2547 = scalar_lea.sflag [#allocation7], 1
    %2548 = vsyncpa %s2547, 1
    %2549 = vsyncpa [#allocation5], 1
    %s2550 = scalar_lea.sflag [#allocation5], 1
    %2551 = vsyncpa %s2550, 1

</llo_original>
